<compile_context>
chip_gen: v6e
topology: v6e:2x2x1
jax: 0.10.0
libtpu: 0.0.40
codegen_flags: <defaults>
</compile_context>

<pallas_src>
import numpy as np

import jax
import jax.numpy as jnp
from jax import lax
from jax.experimental import pallas as pl
from jax.experimental.pallas import tpu as pltpu

N_PIECES = 4
N_ACTIONS = 4
BH = 4
BW = 4
HW = BH * BW                         # 16 board cells per observation
C_IN = N_PIECES + N_ACTIONS - 1      # 7 input channels
TAPW = 8                             # channels padded to 8 per 3x3 tap
PATCH = 9 * TAPW                     # 72 im2col features (tap-major, 8-padded)

# packed parameter slab layout (all row groups 8-aligned)
R_L1 = 0        # rows   0: 80  layer-1 3x3 convs over the 72 patch features
                #        0:32 next1 / 32:48 reward1 / 48:64 game_over1 / 64:80 next3 ob-taps
R_L2 = 80       # rows  80:112 layer-2 1x1 convs (block diagonal over h1's 64 rows)
R_L3 = 112      # rows 112:136 layer-3 1x1 convs over h2's 32 rows (next3 / rew3 / go3)
R_L4 = 136      # rows 136:140 next_ob head (4 x 16)
R_FC = 144      # rows 144:148 fc weights used as a rank->weight gather (4 x 32)
SLAB_ROWS = 152
SLAB_COLS = PATCH


def _ceil_to(v, m):
    return ((v + m - 1) // m) * m


# ----------------------------------------------------------------------------
# pltpu.roll direction probe (run once, eagerly, at import)
# ----------------------------------------------------------------------------
def _probe_roll():
    try:
        def _k(x_ref, o_ref):
            o_ref[...] = pltpu.roll(x_ref[...], 5, axis=1)

        x = jnp.tile(lax.iota(jnp.float32, 256)[None, :], (8, 1))
        y = pl.pallas_call(_k, out_shape=jax.ShapeDtypeStruct((8, 256), jnp.float32))(x)
        v = float(y[0, 0])
        if v == 251.0:            # jnp.roll convention: y[i] = x[i - shift]
            return (True, 1)
        if v == 5.0:              # flipped convention: y[i] = x[i + shift]
            return (True, -1)
        return (False, 1)
    except Exception:
        return (False, 1)


_ROLL_IMPL = _probe_roll()


def _lane_shift(x, k):
    """y[..., i] = x[..., (i + k) % L] for a static integer k."""
    L = x.shape[-1]
    use_pltpu, sign = _ROLL_IMPL
    if use_pltpu:
        amt = (-k * sign) % L
        if amt == 0:
            return x
        return pltpu.roll(x, amt, axis=x.ndim - 1)
    amt = (-k) % L
    if amt == 0:
        return x
    return jnp.roll(x, amt, axis=-1)


# ----------------------------------------------------------------------------
# Kernel
# ----------------------------------------------------------------------------
def network_kernel(xi_ref, w_ref, b_ref, gt_ref, next_ob_ref, tail_ref):
    f32 = jnp.float32
    bf16 = jnp.bfloat16
    L = xi_ref.shape[1]

    W = w_ref[...]                    # (152, 72) bf16 packed weights
    Bv = b_ref[...]                   # (152, 1)  f32 packed biases
    GT = gt_ref[...]                  # (L, OB)   bf16 exact 0/1 obs-grouping

    def mm(a, b):
        return jnp.dot(a, b, preferred_element_type=f32)

    # ---- in-kernel one-hot encode + im2col (3x3, pad=1) ---------------------
    xi = xi_ref[...]                  # (2, L) int32: row0 piece id, row1 action id
    obv = xi[0:1, :]
    acv = xi[1:2, :]
    rows = ([(obv == p).astype(f32) for p in range(1, N_PIECES)]
            + [(acv == a).astype(f32) for a in range(N_ACTIONS)]
            + [jnp.zeros((1, L), f32)])
    x8 = jnp.concatenate(rows, axis=0)                                   # (8, L)

    lane = lax.broadcasted_iota(jnp.int32, (1, L), 1)
    cell = lane & (HW - 1)            # lane = n*16 + h*4 + w
    hh = cell >> 2
    ww = cell & 3

    pieces = []
    for kh in range(3):
        for kw in range(3):
            dh, dw = kh - 1, kw - 1
            p = _lane_shift(x8, dh * BW + dw)        # value at cell (h+dh, w+dw)
            conds = []
            if dh < 0:
                conds.append(hh >= -dh)
            if dh > 0:
                conds.append(hh <= BH - 1 - dh)
            if dw < 0:
                conds.append(ww >= -dw)
            if dw > 0:
                conds.append(ww <= BW - 1 - dw)
            if conds:
                m = conds[0]
                for c in conds[1:]:
                    m = jnp.logical_and(m, c)
                p = p * m.astype(f32)
            pieces.append(p)
    X = jnp.concatenate(pieces, axis=0).astype(bf16)                     # (72, L)

    # ---- fused conv stack (all three branches share each MXU push) ----------
    out1 = mm(W[R_L1:R_L1 + 80, :], X)                                   # (80, L)
    h1 = jnp.maximum(out1[0:64, :] + Bv[0:64, :], 0.0).astype(bf16)
    xtap = out1[64:80, :]             # next3's ob-one-hot taps (no bias / relu)

    h2 = jnp.maximum(mm(W[R_L2:R_L2 + 32, 0:64], h1)
                     + Bv[R_L2:R_L2 + 32, :], 0.0).astype(bf16)          # (32, L)

    y3 = mm(W[R_L3:R_L3 + 24, 0:32], h2) + Bv[R_L3:R_L3 + 24, :]         # (24, L)
    h3n = jnp.maximum(y3[0:16, :] + xtap, 0.0).astype(bf16)              # next branch
    next_ob_ref[...] = mm(W[R_L4:R_L4 + 4, 0:16], h3n) + Bv[R_L4:R_L4 + 4, :]

    # ---- batched per-observation sort + fc (reward & game_over fused) -------
    v2 = y3[16:18, :]                 # (2, L) f32: row0 reward map, row1 game_over map
    vnext = _lane_shift(v2, HW)       # same cell of the next 16-lane block (for wrap)

    rank = jnp.zeros((2, L), f32)
    for s in range(1, HW):
        # value at cell (c - s) mod 16 of the SAME observation
        u = jnp.where(cell < HW - s, v2, vnext)
        wv = _lane_shift(u, -s)
        # strict total order: smaller value, or equal value with smaller cell index
        beats = jnp.logical_or(wv < v2, jnp.logical_and(wv == v2, cell >= s))
        rank = rank + beats.astype(f32)

    r_iota = lax.broadcasted_iota(jnp.int32, (HW, L), 0)
    rank_i = rank.astype(jnp.int32)
    oh_r = (rank_i[0:1, :] == r_iota).astype(f32)
    oh_g = (rank_i[1:2, :] == r_iota).astype(f32)
    onehot = jnp.concatenate([oh_r, oh_g], axis=0).astype(bf16)          # (32, L)

    # weff[o, lane] = fc_weight[o, rank[lane]]  (block-diagonal gather matmul)
    weff = mm(W[R_FC:R_FC + 4, 0:32], onehot)                            # (4, L)
    v4 = jnp.concatenate([v2[0:1], v2[0:1], v2[1:2], v2[1:2]], axis=0)   # (4, L)
    weighted = (weff * v4).astype(bf16)
    # per-observation sum of the 16 weighted cells + bias -> fc logits
    tail_ref[...] = mm(weighted, GT) + Bv[R_FC:R_FC + 4, :]              # (4, OB)


# ----------------------------------------------------------------------------
# Parameters (torch-shaped) and host-side packing into two slabs
# ----------------------------------------------------------------------------
def init_params(key):
    def conv(k, cout, cin, ksz):
        wkey, bkey = jax.random.split(k)
        bound = 1.0 / (cin * ksz * ksz) ** 0.5
        w = jax.random.uniform(wkey, (cout, cin, ksz, ksz), jnp.float32, -bound, bound)
        b = jax.random.uniform(bkey, (cout,), jnp.float32, -bound, bound)
        return w, b

    def linear(k, cout, cin):
        wkey, bkey = jax.random.split(k)
        bound = 1.0 / cin ** 0.5
        w = jax.random.uniform(wkey, (cout, cin), jnp.float32, -bound, bound)
        b = jax.random.uniform(bkey, (cout,), jnp.float32, -bound, bound)
        return w, b

    keys = jax.random.split(key, 12)
    p = {}
    p['w_next1'], p['b_next1'] = conv(keys[0], 32, C_IN, 3)
    p['w_next2'], p['b_next2'] = conv(keys[1], 16, 32, 1)
    p['w_next3'], p['b_next3'] = conv(keys[2], 16, 16 + N_PIECES - 1, 1)
    p['w_next4'], p['b_next4'] = conv(keys[3], N_PIECES, 16, 1)
    p['w_rew1'], p['b_rew1'] = conv(keys[4], 16, C_IN, 3)
    p['w_rew2'], p['b_rew2'] = conv(keys[5], 8, 16, 1)
    p['w_rew3'], p['b_rew3'] = conv(keys[6], 1, 8, 1)
    p['w_fc_rew'], p['b_fc_rew'] = linear(keys[7], 2, 16)
    p['w_go1'], p['b_go1'] = conv(keys[8], 16, C_IN, 3)
    p['w_go2'], p['b_go2'] = conv(keys[9], 8, 16, 1)
    p['w_go3'], p['b_go3'] = conv(keys[10], 1, 8, 1)
    p['w_fc_go'], p['b_fc_go'] = linear(keys[11], 2, 16)
    return p


def pack_params(p):
    f32 = jnp.float32
    W = jnp.zeros((SLAB_ROWS, SLAB_COLS), f32)
    Bv = jnp.zeros((SLAB_ROWS, 1), f32)

    def conv3x3_cols(w):
        # torch weight (cout, 7, 3, 3) -> (cout, 72) columns ordered (tap*8 + channel)
        cout = w.shape[0]
        wt = jnp.transpose(w, (0, 2, 3, 1)).reshape(cout, 9, C_IN)
        wt = jnp.pad(wt, ((0, 0), (0, 0), (0, TAPW - C_IN)))
        return wt.reshape(cout, PATCH)

    # layer 1 (3x3 convs, single shared X push)
    W = W.at[0:32, :].set(conv3x3_cols(p['w_next1']))
    W = W.at[32:48, :].set(conv3x3_cols(p['w_rew1']))
    W = W.at[48:64, :].set(conv3x3_cols(p['w_go1']))
    Bv = Bv.at[0:32, 0].set(p['b_next1'])
    Bv = Bv.at[32:48, 0].set(p['b_rew1'])
    Bv = Bv.at[48:64, 0].set(p['b_go1'])
    # next3's ob-one-hot part rides the layer-1 push: ob channel c == centre tap (tap 4)
    w3 = p['w_next3'].reshape(16, 16 + N_PIECES - 1)
    for c in range(N_PIECES - 1):
        W = W.at[64:80, 4 * TAPW + c].set(w3[:, 16 + c])

    # layer 2 (1x1 convs, block diagonal over h1's 64 rows)
    W = W.at[R_L2:R_L2 + 16, 0:32].set(p['w_next2'].reshape(16, 32))
    W = W.at[R_L2 + 16:R_L2 + 24, 32:48].set(p['w_rew2'].reshape(8, 16))
    W = W.at[R_L2 + 24:R_L2 + 32, 48:64].set(p['w_go2'].reshape(8, 16))
    Bv = Bv.at[R_L2:R_L2 + 16, 0].set(p['b_next2'])
    Bv = Bv.at[R_L2 + 16:R_L2 + 24, 0].set(p['b_rew2'])
    Bv = Bv.at[R_L2 + 24:R_L2 + 32, 0].set(p['b_go2'])

    # layer 3 (1x1 convs over h2's 32 rows)
    W = W.at[R_L3:R_L3 + 16, 0:16].set(w3[:, 0:16])
    W = W.at[R_L3 + 16, 16:24].set(p['w_rew3'].reshape(8))
    W = W.at[R_L3 + 17, 24:32].set(p['w_go3'].reshape(8))
    Bv = Bv.at[R_L3:R_L3 + 16, 0].set(p['b_next3'])
    Bv = Bv.at[R_L3 + 16, 0].set(p['b_rew3'][0])
    Bv = Bv.at[R_L3 + 17, 0].set(p['b_go3'][0])

    # layer 4 (next_ob head)
    W = W.at[R_L4:R_L4 + 4, 0:16].set(p['w_next4'].reshape(N_PIECES, 16))
    Bv = Bv.at[R_L4:R_L4 + 4, 0].set(p['b_next4'])

    # fc heads (used as rank -> weight gather, block diagonal), fused bias rows
    W = W.at[R_FC + 0, 0:16].set(p['w_fc_rew'][0])
    W = W.at[R_FC + 1, 0:16].set(p['w_fc_rew'][1])
    W = W.at[R_FC + 2, 16:32].set(p['w_fc_go'][0])
    W = W.at[R_FC + 3, 16:32].set(p['w_fc_go'][1])
    Bv = Bv.at[R_FC + 0, 0].set(p['b_fc_rew'][0])
    Bv = Bv.at[R_FC + 1, 0].set(p['b_fc_rew'][1])
    Bv = Bv.at[R_FC + 2, 0].set(p['b_fc_go'][0])
    Bv = Bv.at[R_FC + 3, 0].set(p['b_fc_go'][1])
    return W.astype(jnp.bfloat16), Bv


# ----------------------------------------------------------------------------
# Wrapper
# ----------------------------------------------------------------------------
def pick_ob_block(n):
    if n <= 16:
        return _ceil_to(max(n, 1), 8)
    if n <= 256:
        return _ceil_to((n + 1) // 2, 8)     # 2 grid steps -> both v7x TensorCores
    if n <= 2048:
        return 128
    return 256


def network_forward(params, ob, ac):
    """ob: (N, 4, 4) int32 in [0, n_pieces); ac: (N,) int32 in [0, n_actions)."""
    n = ob.shape[0]
    ob_block = pick_ob_block(n)
    n_pad = _ceil_to(n, ob_block)
    steps = n_pad // ob_block
    l_block = HW * ob_block
    l_total = HW * n_pad

    ob = ob.astype(jnp.int32)
    ac = ac.astype(jnp.int32)
    if n_pad != n:
        ob = jnp.pad(ob, ((0, n_pad - n), (0, 0), (0, 0)))
        ac = jnp.pad(ac, (0, n_pad - n))

    # compact integer inputs; one-hot + im2col happen inside the kernel
    ob_flat = ob.reshape(n_pad * HW)
    ac_flat = jnp.broadcast_to(ac[:, None], (n_pad, HW)).reshape(n_pad * HW)
    xi = jnp.stack([ob_flat, ac_flat], axis=0)                       # (2, l_total) int32

    w_slab, b_slab = pack_params(params)

    # per-block lane -> observation grouping matrix (exact 0/1, bf16), fetched once
    grp = jnp.arange(l_block) // HW
    gt = (grp[:, None] == jnp.arange(ob_block)[None, :]).astype(jnp.bfloat16)

    macs = l_total * (80 * PATCH + 32 * 64 + 24 * 32 + 4 * 16 + 4 * 32) \
        + 4 * l_total * ob_block
    bytes_accessed = (xi.size * 4 + w_slab.size * 2 + b_slab.size * 4
                      + gt.size * 2 + 4 * l_total * 4 + 4 * n_pad * 4)

    next_t, tail = pl.pallas_call(
        network_kernel,
        out_shape=(
            jax.ShapeDtypeStruct((N_PIECES, l_total), jnp.float32),
            jax.ShapeDtypeStruct((steps, 4, ob_block), jnp.float32),
        ),
        grid=(steps,),
        in_specs=[
            pl.BlockSpec((2, l_block), lambda b: (0, b)),
            pl.BlockSpec((SLAB_ROWS, SLAB_COLS), lambda b: (0, 0)),
            pl.BlockSpec((SLAB_ROWS, 1), lambda b: (0, 0)),
            pl.BlockSpec((l_block, ob_block), lambda b: (0, 0)),
        ],
        out_specs=(
            pl.BlockSpec((N_PIECES, l_block), lambda b: (0, b)),
            pl.BlockSpec((None, 4, ob_block), lambda b: (b, 0, 0)),
        ),
        compiler_params=pltpu.CompilerParams(dimension_semantics=("parallel",)),
        cost_estimate=pl.CostEstimate(flops=int(2 * macs), transcendentals=0,
                                      bytes_accessed=int(bytes_accessed)),
    )(xi, w_slab, b_slab, gt)

    # un-transpose (glue): lane = n*16 + h*4 + w, row = piece
    next_ob = next_t[:, :HW * n].reshape(N_PIECES, n, BH, BW).transpose(1, 2, 3, 0)
    tail2 = jnp.moveaxis(tail, 0, 1).reshape(4, n_pad)[:, :n]
    reward = tail2[0:2, :].T
    game_over = tail2[2:4, :].T
    return next_ob, reward, game_over


# ----------------------------------------------------------------------------
# Pure-JAX reference (direct transliteration of the torch forward)
# ----------------------------------------------------------------------------
def reference_forward(params, ob, ac):
    n = ob.shape[0]
    ob_oh = jnp.stack([(ob == x) for x in range(1, N_PIECES)], axis=1).astype(jnp.float32)
    ac_oh = jnp.stack([(ac == x) for x in range(N_ACTIONS)], axis=1).astype(jnp.float32)
    ac_map = jnp.broadcast_to(ac_oh[:, :, None, None], (n, N_ACTIONS, BH, BW))
    x = jnp.concatenate([ob_oh, ac_map], axis=1)

    def conv3x3(h, w, b):
        hp = jnp.pad(h, ((0, 0), (0, 0), (1, 1), (1, 1)))
        cols = [hp[:, :, ki:ki + BH, kj:kj + BW] for ki in range(3) for kj in range(3)]
        pat = jnp.stack(cols, axis=2)
        wk = w.reshape(w.shape[0], w.shape[1], 9)
        return jnp.einsum('nckhw,ock->nohw', pat, wk) + b[None, :, None, None]

    def conv1x1(h, w, b):
        wk = w.reshape(w.shape[0], w.shape[1])
        return jnp.einsum('nchw,oc->nohw', h, wk) + b[None, :, None, None]

    relu = lambda t: jnp.maximum(t, 0.0)

    h = relu(conv3x3(x, params['w_next1'], params['b_next1']))
    h = relu(conv1x1(h, params['w_next2'], params['b_next2']))
    h = jnp.concatenate([h, ob_oh], axis=1)
    h = relu(conv1x1(h, params['w_next3'], params['b_next3']))
    next_ob = conv1x1(h, params['w_next4'], params['b_next4']).transpose(0, 2, 3, 1)

    r = relu(conv3x3(x, params['w_rew1'], params['b_rew1']))
    r = relu(conv1x1(r, params['w_rew2'], params['b_rew2']))
    r = conv1x1(r, params['w_rew3'], params['b_rew3']).reshape(n, -1)
    r = jnp.sort(r, axis=-1)
    reward = r @ params['w_fc_rew'].T + params['b_fc_rew']

    g = relu(conv3x3(x, params['w_go1'], params['b_go1']))
    g = relu(conv1x1(g, params['w_go2'], params['b_go2']))
    g = conv1x1(g, params['w_go3'], params['b_go3']).reshape(n, -1)
    g = jnp.sort(g, axis=-1)
    game_over = g @ params['w_fc_go'].T + params['b_fc_go']
    return next_ob, reward, game_over


if __name__ == "__main__":
    key = jax.random.PRNGKey(0)
    pkey, okey, akey = jax.random.split(key, 3)
    params = init_params(pkey)

    N = 2
    ob = jax.random.randint(okey, (N, BH, BW), 0, N_PIECES)   # board of piece ids
    ac = jax.random.randint(akey, (N,), 0, N_ACTIONS)         # action ids

    fwd = jax.jit(network_forward)
    outs = fwd(params, ob, ac)
    jax.block_until_ready(outs)
    next_ob_logits, reward_logits, game_over_logits = outs

    assert next_ob_logits.shape == (N, BH, BW, N_PIECES)
    assert reward_logits.shape == (N, 2)
    assert game_over_logits.shape == (N, 2)

    ref = reference_forward(params, ob, ac)
    for got, want in zip(outs, ref):
        np.testing.assert_allclose(np.asarray(got), np.asarray(want),
                                   rtol=5e-2, atol=5e-2)

    print("KERNEL_OK")
</pallas_src>

<mosaic_0001>
module attributes {stable_mosaic.version = 11 : i64} {
  func.func @_k(%arg0: memref<8x256xf32, #tpu.memory_space<vmem>>, %arg1: memref<8x256xf32, #tpu.memory_space<vmem>>) attributes {dimension_semantics = [], scalar_prefetch = 0 : i64, scratch_operands = 0 : i64, tpu.core_type = #tpu.core_type<tc>} {
    %c0 = arith.constant 0 : index
    %c0_0 = arith.constant 0 : index
    %0 = vector.load %arg0[%c0, %c0_0] : memref<8x256xf32, #tpu.memory_space<vmem>>, vector<8x256xf32>
    %c5_i32 = arith.constant 5 : i32
    %1 = tpu.dynamic_rotate %0 by %c5_i32 dim 1 : vector<8x256xf32>, i32 -> vector<8x256xf32>
    %c0_1 = arith.constant 0 : index
    %c0_2 = arith.constant 0 : index
    %2 = vector.load %arg1[%c0_1, %c0_2] : memref<8x256xf32, #tpu.memory_space<vmem>>, vector<8x256xf32>
    tpu.vector_store %arg1[%c0_1, %c0_2], %1 {strides = array<i32>} : memref<8x256xf32, #tpu.memory_space<vmem>>, vector<8x256xf32>,
    return
  }
}

module attributes {stable_mosaic.version = 11 : i64} {
  func.func @network_kernel(%arg0: i32, %arg1: memref<2x128xi32, #tpu.memory_space<vmem>>, %arg2: memref<152x72xbf16, #tpu.memory_space<vmem>>, %arg3: memref<152x1xf32, #tpu.memory_space<vmem>>, %arg4: memref<128x8xbf16, #tpu.memory_space<vmem>>, %arg5: memref<4x128xf32, #tpu.memory_space<vmem>>, %arg6: memref<1x4x8xf32, #tpu.memory_space<vmem>>) attributes {dimension_semantics = [#tpu.dimension_semantics<parallel>], iteration_bounds = array<i64: 1>, scalar_prefetch = 0 : i64, scratch_operands = 0 : i64, tpu.core_type = #tpu.core_type<tc>, window_params = [{transform_indices = @transform_0, window_bounds = array<i64: 2, 128>}, {pipeline_mode = #tpu.pipeline_mode<synchronous>, transform_indices = @transform_1, window_bounds = array<i64: 152, 72>}, {pipeline_mode = #tpu.pipeline_mode<synchronous>, transform_indices = @transform_2, window_bounds = array<i64: 152, 1>}, {pipeline_mode = #tpu.pipeline_mode<synchronous>, transform_indices = @transform_3, window_bounds = array<i64: 128, 8>}, {transform_indices = @transform_4, window_bounds = array<i64: 4, 128>}, {transform_indices = @transform_5, window_bounds = array<i64: 1, 4, 8>}]} {
    %c0 = arith.constant 0 : index
    %c0_0 = arith.constant 0 : index
    %0 = vector.load %arg2[%c0, %c0_0] : memref<152x72xbf16, #tpu.memory_space<vmem>>, vector<152x72xbf16>
    %c0_1 = arith.constant 0 : index
    %c0_2 = arith.constant 0 : index
    %1 = vector.load %arg3[%c0_1, %c0_2] : memref<152x1xf32, #tpu.memory_space<vmem>>, vector<152x1xf32>
    %c0_3 = arith.constant 0 : index
    %c0_4 = arith.constant 0 : index
    %2 = vector.load %arg4[%c0_3, %c0_4] : memref<128x8xbf16, #tpu.memory_space<vmem>>, vector<128x8xbf16>
    %c0_5 = arith.constant 0 : index
    %c0_6 = arith.constant 0 : index
    %3 = vector.load %arg1[%c0_5, %c0_6] : memref<2x128xi32, #tpu.memory_space<vmem>>, vector<2x128xi32>
    %4 = vector.extract_strided_slice %3 {offsets = [0, 0], sizes = [1, 128], strides = [1, 1]} : vector<2x128xi32> to vector<1x128xi32>
    %5 = vector.extract_strided_slice %3 {offsets = [1, 0], sizes = [1, 128], strides = [1, 1]} : vector<2x128xi32> to vector<1x128xi32>
    %c1_i32 = arith.constant 1 : i32
    %6 = vector.broadcast %c1_i32 : i32 to vector<1x128xi32>
    %7 = arith.cmpi eq, %4, %6 : vector<1x128xi32>
    %8 = arith.extui %7 : vector<1x128xi1> to vector<1x128xi32>
    %9 = arith.sitofp %8 : vector<1x128xi32> to vector<1x128xf32>
    %c2_i32 = arith.constant 2 : i32
    %10 = vector.broadcast %c2_i32 : i32 to vector<1x128xi32>
    %11 = arith.cmpi eq, %4, %10 : vector<1x128xi32>
    %12 = arith.extui %11 : vector<1x128xi1> to vector<1x128xi32>
    %13 = arith.sitofp %12 : vector<1x128xi32> to vector<1x128xf32>
    %c3_i32 = arith.constant 3 : i32
    %14 = vector.broadcast %c3_i32 : i32 to vector<1x128xi32>
    %15 = arith.cmpi eq, %4, %14 : vector<1x128xi32>
    %16 = arith.extui %15 : vector<1x128xi1> to vector<1x128xi32>
    %17 = arith.sitofp %16 : vector<1x128xi32> to vector<1x128xf32>
    %c0_i32 = arith.constant 0 : i32
    %18 = vector.broadcast %c0_i32 : i32 to vector<1x128xi32>
    %19 = arith.cmpi eq, %5, %18 : vector<1x128xi32>
    %20 = arith.extui %19 : vector<1x128xi1> to vector<1x128xi32>
    %21 = arith.sitofp %20 : vector<1x128xi32> to vector<1x128xf32>
    %c1_i32_7 = arith.constant 1 : i32
    %22 = vector.broadcast %c1_i32_7 : i32 to vector<1x128xi32>
    %23 = arith.cmpi eq, %5, %22 : vector<1x128xi32>
    %24 = arith.extui %23 : vector<1x128xi1> to vector<1x128xi32>
    %25 = arith.sitofp %24 : vector<1x128xi32> to vector<1x128xf32>
    %c2_i32_8 = arith.constant 2 : i32
    %26 = vector.broadcast %c2_i32_8 : i32 to vector<1x128xi32>
    %27 = arith.cmpi eq, %5, %26 : vector<1x128xi32>
    %28 = arith.extui %27 : vector<1x128xi1> to vector<1x128xi32>
    %29 = arith.sitofp %28 : vector<1x128xi32> to vector<1x128xf32>
    %c3_i32_9 = arith.constant 3 : i32
    %30 = vector.broadcast %c3_i32_9 : i32 to vector<1x128xi32>
    %31 = arith.cmpi eq, %5, %30 : vector<1x128xi32>
    %32 = arith.extui %31 : vector<1x128xi1> to vector<1x128xi32>
    %33 = arith.sitofp %32 : vector<1x128xi32> to vector<1x128xf32>
    %cst = arith.constant 0.000000e+00 : f32
    %34 = vector.broadcast %cst : f32 to vector<1x128xf32>
    %35 = tpu.concatenate %9, %13, %17, %21, %25, %29, %33, %34 in 0 : vector<1x128xf32>, vector<1x128xf32>, vector<1x128xf32>, vector<1x128xf32>, vector<1x128xf32>, vector<1x128xf32>, vector<1x128xf32>, vector<1x128xf32> -> vector<8x128xf32>
    %36 = tpu.iota {dimensions = array<i32: 1>} : vector<1x128xi32>
    %c15_i32 = arith.constant 15 : i32
    %37 = vector.broadcast %c15_i32 : i32 to vector<1x128xi32>
    %38 = arith.andi %36, %37 : vector<1x128xi32>
    %c2_i32_10 = arith.constant 2 : i32
    %39 = vector.broadcast %c2_i32_10 : i32 to vector<1x128xi32>
    %40 = arith.shrsi %38, %39 : vector<1x128xi32>
    %c3_i32_11 = arith.constant 3 : i32
    %41 = vector.broadcast %c3_i32_11 : i32 to vector<1x128xi32>
    %42 = arith.andi %38, %41 : vector<1x128xi32>
    %43 = vector.extract_strided_slice %35 {offsets = [0, 123], sizes = [8, 5], strides = [1, 1]} : vector<8x128xf32> to vector<8x5xf32>
    %44 = vector.extract_strided_slice %35 {offsets = [0, 0], sizes = [8, 123], strides = [1, 1]} : vector<8x128xf32> to vector<8x123xf32>
    %45 = tpu.concatenate %43, %44 in 1 : vector<8x5xf32>, vector<8x123xf32> -> vector<8x128xf32>
    %c1_i32_12 = arith.constant 1 : i32
    %46 = vector.broadcast %c1_i32_12 : i32 to vector<1x128xi32>
    %47 = arith.cmpi sge, %40, %46 : vector<1x128xi32>
    %c1_i32_13 = arith.constant 1 : i32
    %48 = vector.broadcast %c1_i32_13 : i32 to vector<1x128xi32>
    %49 = arith.cmpi sge, %42, %48 : vector<1x128xi32>
    %50 = arith.andi %47, %49 : vector<1x128xi1>
    %51 = arith.extui %50 : vector<1x128xi1> to vector<1x128xi32>
    %52 = arith.sitofp %51 : vector<1x128xi32> to vector<1x128xf32>
    %53 = vector.broadcast %52 : vector<1x128xf32> to vector<8x128xf32>
    %54 = arith.mulf %45, %53 : vector<8x128xf32>
    %55 = vector.extract_strided_slice %35 {offsets = [0, 124], sizes = [8, 4], strides = [1, 1]} : vector<8x128xf32> to vector<8x4xf32>
    %56 = vector.extract_strided_slice %35 {offsets = [0, 0], sizes = [8, 124], strides = [1, 1]} : vector<8x128xf32> to vector<8x124xf32>
    %57 = tpu.concatenate %55, %56 in 1 : vector<8x4xf32>, vector<8x124xf32> -> vector<8x128xf32>
    %c1_i32_14 = arith.constant 1 : i32
    %58 = vector.broadcast %c1_i32_14 : i32 to vector<1x128xi32>
    %59 = arith.cmpi sge, %40, %58 : vector<1x128xi32>
    %60 = arith.extui %59 : vector<1x128xi1> to vector<1x128xi32>
    %61 = arith.sitofp %60 : vector<1x128xi32> to vector<1x128xf32>
    %62 = vector.broadcast %61 : vector<1x128xf32> to vector<8x128xf32>
    %63 = arith.mulf %57, %62 : vector<8x128xf32>
    %64 = vector.extract_strided_slice %35 {offsets = [0, 125], sizes = [8, 3], strides = [1, 1]} : vector<8x128xf32> to vector<8x3xf32>
    %65 = vector.extract_strided_slice %35 {offsets = [0, 0], sizes = [8, 125], strides = [1, 1]} : vector<8x128xf32> to vector<8x125xf32>
    %66 = tpu.concatenate %64, %65 in 1 : vector<8x3xf32>, vector<8x125xf32> -> vector<8x128xf32>
    %c1_i32_15 = arith.constant 1 : i32
    %67 = vector.broadcast %c1_i32_15 : i32 to vector<1x128xi32>
    %68 = arith.cmpi sge, %40, %67 : vector<1x128xi32>
    %c2_i32_16 = arith.constant 2 : i32
    %69 = vector.broadcast %c2_i32_16 : i32 to vector<1x128xi32>
    %70 = arith.cmpi sle, %42, %69 : vector<1x128xi32>
    %71 = arith.andi %68, %70 : vector<1x128xi1>
    %72 = arith.extui %71 : vector<1x128xi1> to vector<1x128xi32>
    %73 = arith.sitofp %72 : vector<1x128xi32> to vector<1x128xf32>
    %74 = vector.broadcast %73 : vector<1x128xf32> to vector<8x128xf32>
    %75 = arith.mulf %66, %74 : vector<8x128xf32>
    %76 = vector.extract_strided_slice %35 {offsets = [0, 127], sizes = [8, 1], strides = [1, 1]} : vector<8x128xf32> to vector<8x1xf32>
    %77 = vector.extract_strided_slice %35 {offsets = [0, 0], sizes = [8, 127], strides = [1, 1]} : vector<8x128xf32> to vector<8x127xf32>
    %78 = tpu.concatenate %76, %77 in 1 : vector<8x1xf32>, vector<8x127xf32> -> vector<8x128xf32>
    %c1_i32_17 = arith.constant 1 : i32
    %79 = vector.broadcast %c1_i32_17 : i32 to vector<1x128xi32>
    %80 = arith.cmpi sge, %42, %79 : vector<1x128xi32>
    %81 = arith.extui %80 : vector<1x128xi1> to vector<1x128xi32>
    %82 = arith.sitofp %81 : vector<1x128xi32> to vector<1x128xf32>
    %83 = vector.broadcast %82 : vector<1x128xf32> to vector<8x128xf32>
    %84 = arith.mulf %78, %83 : vector<8x128xf32>
    %85 = vector.extract_strided_slice %35 {offsets = [0, 1], sizes = [8, 127], strides = [1, 1]} : vector<8x128xf32> to vector<8x127xf32>
    %86 = vector.extract_strided_slice %35 {offsets = [0, 0], sizes = [8, 1], strides = [1, 1]} : vector<8x128xf32> to vector<8x1xf32>
    %87 = tpu.concatenate %85, %86 in 1 : vector<8x127xf32>, vector<8x1xf32> -> vector<8x128xf32>
    %c2_i32_18 = arith.constant 2 : i32
    %88 = vector.broadcast %c2_i32_18 : i32 to vector<1x128xi32>
    %89 = arith.cmpi sle, %42, %88 : vector<1x128xi32>
    %90 = arith.extui %89 : vector<1x128xi1> to vector<1x128xi32>
    %91 = arith.sitofp %90 : vector<1x128xi32> to vector<1x128xf32>
    %92 = vector.broadcast %91 : vector<1x128xf32> to vector<8x128xf32>
    %93 = arith.mulf %87, %92 : vector<8x128xf32>
    %94 = vector.extract_strided_slice %35 {offsets = [0, 3], sizes = [8, 125], strides = [1, 1]} : vector<8x128xf32> to vector<8x125xf32>
    %95 = vector.extract_strided_slice %35 {offsets = [0, 0], sizes = [8, 3], strides = [1, 1]} : vector<8x128xf32> to vector<8x3xf32>
    %96 = tpu.concatenate %94, %95 in 1 : vector<8x125xf32>, vector<8x3xf32> -> vector<8x128xf32>
    %c2_i32_19 = arith.constant 2 : i32
    %97 = vector.broadcast %c2_i32_19 : i32 to vector<1x128xi32>
    %98 = arith.cmpi sle, %40, %97 : vector<1x128xi32>
    %c1_i32_20 = arith.constant 1 : i32
    %99 = vector.broadcast %c1_i32_20 : i32 to vector<1x128xi32>
    %100 = arith.cmpi sge, %42, %99 : vector<1x128xi32>
    %101 = arith.andi %98, %100 : vector<1x128xi1>
    %102 = arith.extui %101 : vector<1x128xi1> to vector<1x128xi32>
    %103 = arith.sitofp %102 : vector<1x128xi32> to vector<1x128xf32>
    %104 = vector.broadcast %103 : vector<1x128xf32> to vector<8x128xf32>
    %105 = arith.mulf %96, %104 : vector<8x128xf32>
    %106 = vector.extract_strided_slice %35 {offsets = [0, 4], sizes = [8, 124], strides = [1, 1]} : vector<8x128xf32> to vector<8x124xf32>
    %107 = vector.extract_strided_slice %35 {offsets = [0, 0], sizes = [8, 4], strides = [1, 1]} : vector<8x128xf32> to vector<8x4xf32>
    %108 = tpu.concatenate %106, %107 in 1 : vector<8x124xf32>, vector<8x4xf32> -> vector<8x128xf32>
    %c2_i32_21 = arith.constant 2 : i32
    %109 = vector.broadcast %c2_i32_21 : i32 to vector<1x128xi32>
    %110 = arith.cmpi sle, %40, %109 : vector<1x128xi32>
    %111 = arith.extui %110 : vector<1x128xi1> to vector<1x128xi32>
    %112 = arith.sitofp %111 : vector<1x128xi32> to vector<1x128xf32>
    %113 = vector.broadcast %112 : vector<1x128xf32> to vector<8x128xf32>
    %114 = arith.mulf %108, %113 : vector<8x128xf32>
    %115 = vector.extract_strided_slice %35 {offsets = [0, 5], sizes = [8, 123], strides = [1, 1]} : vector<8x128xf32> to vector<8x123xf32>
    %116 = vector.extract_strided_slice %35 {offsets = [0, 0], sizes = [8, 5], strides = [1, 1]} : vector<8x128xf32> to vector<8x5xf32>
    %117 = tpu.concatenate %115, %116 in 1 : vector<8x123xf32>, vector<8x5xf32> -> vector<8x128xf32>
    %c2_i32_22 = arith.constant 2 : i32
    %118 = vector.broadcast %c2_i32_22 : i32 to vector<1x128xi32>
    %119 = arith.cmpi sle, %40, %118 : vector<1x128xi32>
    %c2_i32_23 = arith.constant 2 : i32
    %120 = vector.broadcast %c2_i32_23 : i32 to vector<1x128xi32>
    %121 = arith.cmpi sle, %42, %120 : vector<1x128xi32>
    %122 = arith.andi %119, %121 : vector<1x128xi1>
    %123 = arith.extui %122 : vector<1x128xi1> to vector<1x128xi32>
    %124 = arith.sitofp %123 : vector<1x128xi32> to vector<1x128xf32>
    %125 = vector.broadcast %124 : vector<1x128xf32> to vector<8x128xf32>
    %126 = arith.mulf %117, %125 : vector<8x128xf32>
    %127 = tpu.concatenate %54, %63, %75, %84, %35, %93, %105, %114, %126 in 0 : vector<8x128xf32>, vector<8x128xf32>, vector<8x128xf32>, vector<8x128xf32>, vector<8x128xf32>, vector<8x128xf32>, vector<8x128xf32>, vector<8x128xf32>, vector<8x128xf32> -> vector<72x128xf32>
    %128 = arith.truncf %127 : vector<72x128xf32> to vector<72x128xbf16>
    %129 = vector.extract_strided_slice %0 {offsets = [0, 0], sizes = [80, 72], strides = [1, 1]} : vector<152x72xbf16> to vector<80x72xbf16>
    %cst_24 = arith.constant dense<0.000000e+00> : vector<80x128xf32>
    %130 = tpu.matmul %129, %128, %cst_24 {dimension_numbers = #tpu.dot_dimension_numbers<[1], [0], [0], [1], [0, 0, 1, 1], [], []>} : vector<80x72xbf16>, vector<72x128xbf16>, vector<80x128xf32> -> vector<80x128xf32>
    %131 = vector.extract_strided_slice %130 {offsets = [0, 0], sizes = [64, 128], strides = [1, 1]} : vector<80x128xf32> to vector<64x128xf32>
    %132 = vector.extract_strided_slice %1 {offsets = [0, 0], sizes = [64, 1], strides = [1, 1]} : vector<152x1xf32> to vector<64x1xf32>
    %133 = vector.broadcast %132 : vector<64x1xf32> to vector<64x128xf32>
    %134 = arith.addf %131, %133 : vector<64x128xf32>
    %cst_25 = arith.constant 0.000000e+00 : f32
    %135 = vector.broadcast %cst_25 : f32 to vector<64x128xf32>
    %136 = arith.maximumf %134, %135 : vector<64x128xf32>
    %137 = arith.truncf %136 : vector<64x128xf32> to vector<64x128xbf16>
    %138 = vector.extract_strided_slice %130 {offsets = [64, 0], sizes = [16, 128], strides = [1, 1]} : vector<80x128xf32> to vector<16x128xf32>
    %139 = vector.extract_strided_slice %0 {offsets = [80, 0], sizes = [32, 64], strides = [1, 1]} : vector<152x72xbf16> to vector<32x64xbf16>
    %cst_26 = arith.constant dense<0.000000e+00> : vector<32x128xf32>
    %140 = tpu.matmul %139, %137, %cst_26 {dimension_numbers = #tpu.dot_dimension_numbers<[1], [0], [0], [1], [0, 0, 1, 1], [], []>} : vector<32x64xbf16>, vector<64x128xbf16>, vector<32x128xf32> -> vector<32x128xf32>
    %141 = vector.extract_strided_slice %1 {offsets = [80, 0], sizes = [32, 1], strides = [1, 1]} : vector<152x1xf32> to vector<32x1xf32>
    %142 = vector.broadcast %141 : vector<32x1xf32> to vector<32x128xf32>
    %143 = arith.addf %140, %142 : vector<32x128xf32>
    %cst_27 = arith.constant 0.000000e+00 : f32
    %144 = vector.broadcast %cst_27 : f32 to vector<32x128xf32>
    %145 = arith.maximumf %143, %144 : vector<32x128xf32>
    %146 = arith.truncf %145 : vector<32x128xf32> to vector<32x128xbf16>
    %147 = vector.extract_strided_slice %0 {offsets = [112, 0], sizes = [24, 32], strides = [1, 1]} : vector<152x72xbf16> to vector<24x32xbf16>
    %cst_28 = arith.constant dense<0.000000e+00> : vector<24x128xf32>
    %148 = tpu.matmul %147, %146, %cst_28 {dimension_numbers = #tpu.dot_dimension_numbers<[1], [0], [0], [1], [0, 0, 1, 1], [], []>} : vector<24x32xbf16>, vector<32x128xbf16>, vector<24x128xf32> -> vector<24x128xf32>
    %149 = vector.extract_strided_slice %1 {offsets = [112, 0], sizes = [24, 1], strides = [1, 1]} : vector<152x1xf32> to vector<24x1xf32>
    %150 = vector.broadcast %149 : vector<24x1xf32> to vector<24x128xf32>
    %151 = arith.addf %148, %150 : vector<24x128xf32>
    %152 = vector.extract_strided_slice %151 {offsets = [0, 0], sizes = [16, 128], strides = [1, 1]} : vector<24x128xf32> to vector<16x128xf32>
    %153 = arith.addf %152, %138 : vector<16x128xf32>
    %cst_29 = arith.constant 0.000000e+00 : f32
    %154 = vector.broadcast %cst_29 : f32 to vector<16x128xf32>
    %155 = arith.maximumf %153, %154 : vector<16x128xf32>
    %156 = arith.truncf %155 : vector<16x128xf32> to vector<16x128xbf16>
    %157 = vector.extract_strided_slice %0 {offsets = [136, 0], sizes = [4, 16], strides = [1, 1]} : vector<152x72xbf16> to vector<4x16xbf16>
    %cst_30 = arith.constant dense<0.000000e+00> : vector<4x128xf32>
    %158 = tpu.matmul %157, %156, %cst_30 {dimension_numbers = #tpu.dot_dimension_numbers<[1], [0], [0], [1], [0, 0, 1, 1], [], []>} : vector<4x16xbf16>, vector<16x128xbf16>, vector<4x128xf32> -> vector<4x128xf32>
    %159 = vector.extract_strided_slice %1 {offsets = [136, 0], sizes = [4, 1], strides = [1, 1]} : vector<152x1xf32> to vector<4x1xf32>
    %160 = vector.broadcast %159 : vector<4x1xf32> to vector<4x128xf32>
    %161 = arith.addf %158, %160 : vector<4x128xf32>
    %c0_31 = arith.constant 0 : index
    %c0_32 = arith.constant 0 : index
    %162 = vector.load %arg5[%c0_31, %c0_32] : memref<4x128xf32, #tpu.memory_space<vmem>>, vector<4x128xf32>
    tpu.vector_store %arg5[%c0_31, %c0_32], %161 {strides = array<i32>} : memref<4x128xf32, #tpu.memory_space<vmem>>, vector<4x128xf32>,
    %163 = vector.extract_strided_slice %151 {offsets = [16, 0], sizes = [2, 128], strides = [1, 1]} : vector<24x128xf32> to vector<2x128xf32>
    %164 = vector.extract_strided_slice %163 {offsets = [0, 16], sizes = [2, 112], strides = [1, 1]} : vector<2x128xf32> to vector<2x112xf32>
    %165 = vector.extract_strided_slice %163 {offsets = [0, 0], sizes = [2, 16], strides = [1, 1]} : vector<2x128xf32> to vector<2x16xf32>
    %166 = tpu.concatenate %164, %165 in 1 : vector<2x112xf32>, vector<2x16xf32> -> vector<2x128xf32>
    %cst_33 = arith.constant 0.000000e+00 : f32
    %167 = vector.broadcast %cst_33 : f32 to vector<2x128xf32>
    %c15_i32_34 = arith.constant 15 : i32
    %168 = vector.broadcast %c15_i32_34 : i32 to vector<1x128xi32>
    %169 = arith.cmpi slt, %38, %168 : vector<1x128xi32>
    %170 = vector.shape_cast %169 : vector<1x128xi1> to vector<1x128xi1>
    %171 = vector.broadcast %170 : vector<1x128xi1> to vector<2x128xi1>
    %172 = arith.select %171, %163, %166 : vector<2x128xi1>, vector<2x128xf32>
    %173 = vector.extract_strided_slice %172 {offsets = [0, 127], sizes = [2, 1], strides = [1, 1]} : vector<2x128xf32> to vector<2x1xf32>
    %174 = vector.extract_strided_slice %172 {offsets = [0, 0], sizes = [2, 127], strides = [1, 1]} : vector<2x128xf32> to vector<2x127xf32>
    %175 = tpu.concatenate %173, %174 in 1 : vector<2x1xf32>, vector<2x127xf32> -> vector<2x128xf32>
    %176 = arith.cmpf olt, %175, %163 : vector<2x128xf32>
    %177 = arith.cmpf oeq, %175, %163 : vector<2x128xf32>
    %c1_i32_35 = arith.constant 1 : i32
    %178 = vector.broadcast %c1_i32_35 : i32 to vector<1x128xi32>
    %179 = arith.cmpi sge, %38, %178 : vector<1x128xi32>
    %180 = vector.broadcast %179 : vector<1x128xi1> to vector<2x128xi1>
    %181 = arith.andi %177, %180 : vector<2x128xi1>
    %182 = arith.ori %176, %181 : vector<2x128xi1>
    %183 = arith.extui %182 : vector<2x128xi1> to vector<2x128xi32>
    %184 = arith.sitofp %183 : vector<2x128xi32> to vector<2x128xf32>
    %185 = arith.addf %167, %184 : vector<2x128xf32>
    %c14_i32 = arith.constant 14 : i32
    %186 = vector.broadcast %c14_i32 : i32 to vector<1x128xi32>
    %187 = arith.cmpi slt, %38, %186 : vector<1x128xi32>
    %188 = vector.shape_cast %187 : vector<1x128xi1> to vector<1x128xi1>
    %189 = vector.broadcast %188 : vector<1x128xi1> to vector<2x128xi1>
    %190 = arith.select %189, %163, %166 : vector<2x128xi1>, vector<2x128xf32>
    %191 = vector.extract_strided_slice %190 {offsets = [0, 126], sizes = [2, 2], strides = [1, 1]} : vector<2x128xf32> to vector<2x2xf32>
    %192 = vector.extract_strided_slice %190 {offsets = [0, 0], sizes = [2, 126], strides = [1, 1]} : vector<2x128xf32> to vector<2x126xf32>
    %193 = tpu.concatenate %191, %192 in 1 : vector<2x2xf32>, vector<2x126xf32> -> vector<2x128xf32>
    %194 = arith.cmpf olt, %193, %163 : vector<2x128xf32>
    %195 = arith.cmpf oeq, %193, %163 : vector<2x128xf32>
    %c2_i32_36 = arith.constant 2 : i32
    %196 = vector.broadcast %c2_i32_36 : i32 to vector<1x128xi32>
    %197 = arith.cmpi sge, %38, %196 : vector<1x128xi32>
    %198 = vector.broadcast %197 : vector<1x128xi1> to vector<2x128xi1>
    %199 = arith.andi %195, %198 : vector<2x128xi1>
    %200 = arith.ori %194, %199 : vector<2x128xi1>
    %201 = arith.extui %200 : vector<2x128xi1> to vector<2x128xi32>
    %202 = arith.sitofp %201 : vector<2x128xi32> to vector<2x128xf32>
    %203 = arith.addf %185, %202 : vector<2x128xf32>
    %c13_i32 = arith.constant 13 : i32
    %204 = vector.broadcast %c13_i32 : i32 to vector<1x128xi32>
    %205 = arith.cmpi slt, %38, %204 : vector<1x128xi32>
    %206 = vector.shape_cast %205 : vector<1x128xi1> to vector<1x128xi1>
    %207 = vector.broadcast %206 : vector<1x128xi1> to vector<2x128xi1>
    %208 = arith.select %207, %163, %166 : vector<2x128xi1>, vector<2x128xf32>
    %209 = vector.extract_strided_slice %208 {offsets = [0, 125], sizes = [2, 3], strides = [1, 1]} : vector<2x128xf32> to vector<2x3xf32>
    %210 = vector.extract_strided_slice %208 {offsets = [0, 0], sizes = [2, 125], strides = [1, 1]} : vector<2x128xf32> to vector<2x125xf32>
    %211 = tpu.concatenate %209, %210 in 1 : vector<2x3xf32>, vector<2x125xf32> -> vector<2x128xf32>
    %212 = arith.cmpf olt, %211, %163 : vector<2x128xf32>
    %213 = arith.cmpf oeq, %211, %163 : vector<2x128xf32>
    %c3_i32_37 = arith.constant 3 : i32
    %214 = vector.broadcast %c3_i32_37 : i32 to vector<1x128xi32>
    %215 = arith.cmpi sge, %38, %214 : vector<1x128xi32>
    %216 = vector.broadcast %215 : vector<1x128xi1> to vector<2x128xi1>
    %217 = arith.andi %213, %216 : vector<2x128xi1>
    %218 = arith.ori %212, %217 : vector<2x128xi1>
    %219 = arith.extui %218 : vector<2x128xi1> to vector<2x128xi32>
    %220 = arith.sitofp %219 : vector<2x128xi32> to vector<2x128xf32>
    %221 = arith.addf %203, %220 : vector<2x128xf32>
    %c12_i32 = arith.constant 12 : i32
    %222 = vector.broadcast %c12_i32 : i32 to vector<1x128xi32>
    %223 = arith.cmpi slt, %38, %222 : vector<1x128xi32>
    %224 = vector.shape_cast %223 : vector<1x128xi1> to vector<1x128xi1>
    %225 = vector.broadcast %224 : vector<1x128xi1> to vector<2x128xi1>
    %226 = arith.select %225, %163, %166 : vector<2x128xi1>, vector<2x128xf32>
    %227 = vector.extract_strided_slice %226 {offsets = [0, 124], sizes = [2, 4], strides = [1, 1]} : vector<2x128xf32> to vector<2x4xf32>
    %228 = vector.extract_strided_slice %226 {offsets = [0, 0], sizes = [2, 124], strides = [1, 1]} : vector<2x128xf32> to vector<2x124xf32>
    %229 = tpu.concatenate %227, %228 in 1 : vector<2x4xf32>, vector<2x124xf32> -> vector<2x128xf32>
    %230 = arith.cmpf olt, %229, %163 : vector<2x128xf32>
    %231 = arith.cmpf oeq, %229, %163 : vector<2x128xf32>
    %c4_i32 = arith.constant 4 : i32
    %232 = vector.broadcast %c4_i32 : i32 to vector<1x128xi32>
    %233 = arith.cmpi sge, %38, %232 : vector<1x128xi32>
    %234 = vector.broadcast %233 : vector<1x128xi1> to vector<2x128xi1>
    %235 = arith.andi %231, %234 : vector<2x128xi1>
    %236 = arith.ori %230, %235 : vector<2x128xi1>
    %237 = arith.extui %236 : vector<2x128xi1> to vector<2x128xi32>
    %238 = arith.sitofp %237 : vector<2x128xi32> to vector<2x128xf32>
    %239 = arith.addf %221, %238 : vector<2x128xf32>
    %c11_i32 = arith.constant 11 : i32
    %240 = vector.broadcast %c11_i32 : i32 to vector<1x128xi32>
    %241 = arith.cmpi slt, %38, %240 : vector<1x128xi32>
    %242 = vector.shape_cast %241 : vector<1x128xi1> to vector<1x128xi1>
    %243 = vector.broadcast %242 : vector<1x128xi1> to vector<2x128xi1>
    %244 = arith.select %243, %163, %166 : vector<2x128xi1>, vector<2x128xf32>
    %245 = vector.extract_strided_slice %244 {offsets = [0, 123], sizes = [2, 5], strides = [1, 1]} : vector<2x128xf32> to vector<2x5xf32>
    %246 = vector.extract_strided_slice %244 {offsets = [0, 0], sizes = [2, 123], strides = [1, 1]} : vector<2x128xf32> to vector<2x123xf32>
    %247 = tpu.concatenate %245, %246 in 1 : vector<2x5xf32>, vector<2x123xf32> -> vector<2x128xf32>
    %248 = arith.cmpf olt, %247, %163 : vector<2x128xf32>
    %249 = arith.cmpf oeq, %247, %163 : vector<2x128xf32>
    %c5_i32 = arith.constant 5 : i32
    %250 = vector.broadcast %c5_i32 : i32 to vector<1x128xi32>
    %251 = arith.cmpi sge, %38, %250 : vector<1x128xi32>
    %252 = vector.broadcast %251 : vector<1x128xi1> to vector<2x128xi1>
    %253 = arith.andi %249, %252 : vector<2x128xi1>
    %254 = arith.ori %248, %253 : vector<2x128xi1>
    %255 = arith.extui %254 : vector<2x128xi1> to vector<2x128xi32>
    %256 = arith.sitofp %255 : vector<2x128xi32> to vector<2x128xf32>
    %257 = arith.addf %239, %256 : vector<2x128xf32>
    %c10_i32 = arith.constant 10 : i32
    %258 = vector.broadcast %c10_i32 : i32 to vector<1x128xi32>
    %259 = arith.cmpi slt, %38, %258 : vector<1x128xi32>
    %260 = vector.shape_cast %259 : vector<1x128xi1> to vector<1x128xi1>
    %261 = vector.broadcast %260 : vector<1x128xi1> to vector<2x128xi1>
    %262 = arith.select %261, %163, %166 : vector<2x128xi1>, vector<2x128xf32>
    %263 = vector.extract_strided_slice %262 {offsets = [0, 122], sizes = [2, 6], strides = [1, 1]} : vector<2x128xf32> to vector<2x6xf32>
    %264 = vector.extract_strided_slice %262 {offsets = [0, 0], sizes = [2, 122], strides = [1, 1]} : vector<2x128xf32> to vector<2x122xf32>
    %265 = tpu.concatenate %263, %264 in 1 : vector<2x6xf32>, vector<2x122xf32> -> vector<2x128xf32>
    %266 = arith.cmpf olt, %265, %163 : vector<2x128xf32>
    %267 = arith.cmpf oeq, %265, %163 : vector<2x128xf32>
    %c6_i32 = arith.constant 6 : i32
    %268 = vector.broadcast %c6_i32 : i32 to vector<1x128xi32>
    %269 = arith.cmpi sge, %38, %268 : vector<1x128xi32>
    %270 = vector.broadcast %269 : vector<1x128xi1> to vector<2x128xi1>
    %271 = arith.andi %267, %270 : vector<2x128xi1>
    %272 = arith.ori %266, %271 : vector<2x128xi1>
    %273 = arith.extui %272 : vector<2x128xi1> to vector<2x128xi32>
    %274 = arith.sitofp %273 : vector<2x128xi32> to vector<2x128xf32>
    %275 = arith.addf %257, %274 : vector<2x128xf32>
    %c9_i32 = arith.constant 9 : i32
    %276 = vector.broadcast %c9_i32 : i32 to vector<1x128xi32>
    %277 = arith.cmpi slt, %38, %276 : vector<1x128xi32>
    %278 = vector.shape_cast %277 : vector<1x128xi1> to vector<1x128xi1>
    %279 = vector.broadcast %278 : vector<1x128xi1> to vector<2x128xi1>
    %280 = arith.select %279, %163, %166 : vector<2x128xi1>, vector<2x128xf32>
    %281 = vector.extract_strided_slice %280 {offsets = [0, 121], sizes = [2, 7], strides = [1, 1]} : vector<2x128xf32> to vector<2x7xf32>
    %282 = vector.extract_strided_slice %280 {offsets = [0, 0], sizes = [2, 121], strides = [1, 1]} : vector<2x128xf32> to vector<2x121xf32>
    %283 = tpu.concatenate %281, %282 in 1 : vector<2x7xf32>, vector<2x121xf32> -> vector<2x128xf32>
    %284 = arith.cmpf olt, %283, %163 : vector<2x128xf32>
    %285 = arith.cmpf oeq, %283, %163 : vector<2x128xf32>
    %c7_i32 = arith.constant 7 : i32
    %286 = vector.broadcast %c7_i32 : i32 to vector<1x128xi32>
    %287 = arith.cmpi sge, %38, %286 : vector<1x128xi32>
    %288 = vector.broadcast %287 : vector<1x128xi1> to vector<2x128xi1>
    %289 = arith.andi %285, %288 : vector<2x128xi1>
    %290 = arith.ori %284, %289 : vector<2x128xi1>
    %291 = arith.extui %290 : vector<2x128xi1> to vector<2x128xi32>
    %292 = arith.sitofp %291 : vector<2x128xi32> to vector<2x128xf32>
    %293 = arith.addf %275, %292 : vector<2x128xf32>
    %c8_i32 = arith.constant 8 : i32
    %294 = vector.broadcast %c8_i32 : i32 to vector<1x128xi32>
    %295 = arith.cmpi slt, %38, %294 : vector<1x128xi32>
    %296 = vector.shape_cast %295 : vector<1x128xi1> to vector<1x128xi1>
    %297 = vector.broadcast %296 : vector<1x128xi1> to vector<2x128xi1>
    %298 = arith.select %297, %163, %166 : vector<2x128xi1>, vector<2x128xf32>
    %299 = vector.extract_strided_slice %298 {offsets = [0, 120], sizes = [2, 8], strides = [1, 1]} : vector<2x128xf32> to vector<2x8xf32>
    %300 = vector.extract_strided_slice %298 {offsets = [0, 0], sizes = [2, 120], strides = [1, 1]} : vector<2x128xf32> to vector<2x120xf32>
    %301 = tpu.concatenate %299, %300 in 1 : vector<2x8xf32>, vector<2x120xf32> -> vector<2x128xf32>
    %302 = arith.cmpf olt, %301, %163 : vector<2x128xf32>
    %303 = arith.cmpf oeq, %301, %163 : vector<2x128xf32>
    %c8_i32_38 = arith.constant 8 : i32
    %304 = vector.broadcast %c8_i32_38 : i32 to vector<1x128xi32>
    %305 = arith.cmpi sge, %38, %304 : vector<1x128xi32>
    %306 = vector.broadcast %305 : vector<1x128xi1> to vector<2x128xi1>
    %307 = arith.andi %303, %306 : vector<2x128xi1>
    %308 = arith.ori %302, %307 : vector<2x128xi1>
    %309 = arith.extui %308 : vector<2x128xi1> to vector<2x128xi32>
    %310 = arith.sitofp %309 : vector<2x128xi32> to vector<2x128xf32>
    %311 = arith.addf %293, %310 : vector<2x128xf32>
    %c7_i32_39 = arith.constant 7 : i32
    %312 = vector.broadcast %c7_i32_39 : i32 to vector<1x128xi32>
    %313 = arith.cmpi slt, %38, %312 : vector<1x128xi32>
    %314 = vector.shape_cast %313 : vector<1x128xi1> to vector<1x128xi1>
    %315 = vector.broadcast %314 : vector<1x128xi1> to vector<2x128xi1>
    %316 = arith.select %315, %163, %166 : vector<2x128xi1>, vector<2x128xf32>
    %317 = vector.extract_strided_slice %316 {offsets = [0, 119], sizes = [2, 9], strides = [1, 1]} : vector<2x128xf32> to vector<2x9xf32>
    %318 = vector.extract_strided_slice %316 {offsets = [0, 0], sizes = [2, 119], strides = [1, 1]} : vector<2x128xf32> to vector<2x119xf32>
    %319 = tpu.concatenate %317, %318 in 1 : vector<2x9xf32>, vector<2x119xf32> -> vector<2x128xf32>
    %320 = arith.cmpf olt, %319, %163 : vector<2x128xf32>
    %321 = arith.cmpf oeq, %319, %163 : vector<2x128xf32>
    %c9_i32_40 = arith.constant 9 : i32
    %322 = vector.broadcast %c9_i32_40 : i32 to vector<1x128xi32>
    %323 = arith.cmpi sge, %38, %322 : vector<1x128xi32>
    %324 = vector.broadcast %323 : vector<1x128xi1> to vector<2x128xi1>
    %325 = arith.andi %321, %324 : vector<2x128xi1>
    %326 = arith.ori %320, %325 : vector<2x128xi1>
    %327 = arith.extui %326 : vector<2x128xi1> to vector<2x128xi32>
    %328 = arith.sitofp %327 : vector<2x128xi32> to vector<2x128xf32>
    %329 = arith.addf %311, %328 : vector<2x128xf32>
    %c6_i32_41 = arith.constant 6 : i32
    %330 = vector.broadcast %c6_i32_41 : i32 to vector<1x128xi32>
    %331 = arith.cmpi slt, %38, %330 : vector<1x128xi32>
    %332 = vector.shape_cast %331 : vector<1x128xi1> to vector<1x128xi1>
    %333 = vector.broadcast %332 : vector<1x128xi1> to vector<2x128xi1>
    %334 = arith.select %333, %163, %166 : vector<2x128xi1>, vector<2x128xf32>
    %335 = vector.extract_strided_slice %334 {offsets = [0, 118], sizes = [2, 10], strides = [1, 1]} : vector<2x128xf32> to vector<2x10xf32>
    %336 = vector.extract_strided_slice %334 {offsets = [0, 0], sizes = [2, 118], strides = [1, 1]} : vector<2x128xf32> to vector<2x118xf32>
    %337 = tpu.concatenate %335, %336 in 1 : vector<2x10xf32>, vector<2x118xf32> -> vector<2x128xf32>
    %338 = arith.cmpf olt, %337, %163 : vector<2x128xf32>
    %339 = arith.cmpf oeq, %337, %163 : vector<2x128xf32>
    %c10_i32_42 = arith.constant 10 : i32
    %340 = vector.broadcast %c10_i32_42 : i32 to vector<1x128xi32>
    %341 = arith.cmpi sge, %38, %340 : vector<1x128xi32>
    %342 = vector.broadcast %341 : vector<1x128xi1> to vector<2x128xi1>
    %343 = arith.andi %339, %342 : vector<2x128xi1>
    %344 = arith.ori %338, %343 : vector<2x128xi1>
    %345 = arith.extui %344 : vector<2x128xi1> to vector<2x128xi32>
    %346 = arith.sitofp %345 : vector<2x128xi32> to vector<2x128xf32>
    %347 = arith.addf %329, %346 : vector<2x128xf32>
    %c5_i32_43 = arith.constant 5 : i32
    %348 = vector.broadcast %c5_i32_43 : i32 to vector<1x128xi32>
    %349 = arith.cmpi slt, %38, %348 : vector<1x128xi32>
    %350 = vector.shape_cast %349 : vector<1x128xi1> to vector<1x128xi1>
    %351 = vector.broadcast %350 : vector<1x128xi1> to vector<2x128xi1>
    %352 = arith.select %351, %163, %166 : vector<2x128xi1>, vector<2x128xf32>
    %353 = vector.extract_strided_slice %352 {offsets = [0, 117], sizes = [2, 11], strides = [1, 1]} : vector<2x128xf32> to vector<2x11xf32>
    %354 = vector.extract_strided_slice %352 {offsets = [0, 0], sizes = [2, 117], strides = [1, 1]} : vector<2x128xf32> to vector<2x117xf32>
    %355 = tpu.concatenate %353, %354 in 1 : vector<2x11xf32>, vector<2x117xf32> -> vector<2x128xf32>
    %356 = arith.cmpf olt, %355, %163 : vector<2x128xf32>
    %357 = arith.cmpf oeq, %355, %163 : vector<2x128xf32>
    %c11_i32_44 = arith.constant 11 : i32
    %358 = vector.broadcast %c11_i32_44 : i32 to vector<1x128xi32>
    %359 = arith.cmpi sge, %38, %358 : vector<1x128xi32>
    %360 = vector.broadcast %359 : vector<1x128xi1> to vector<2x128xi1>
    %361 = arith.andi %357, %360 : vector<2x128xi1>
    %362 = arith.ori %356, %361 : vector<2x128xi1>
    %363 = arith.extui %362 : vector<2x128xi1> to vector<2x128xi32>
    %364 = arith.sitofp %363 : vector<2x128xi32> to vector<2x128xf32>
    %365 = arith.addf %347, %364 : vector<2x128xf32>
    %c4_i32_45 = arith.constant 4 : i32
    %366 = vector.broadcast %c4_i32_45 : i32 to vector<1x128xi32>
    %367 = arith.cmpi slt, %38, %366 : vector<1x128xi32>
    %368 = vector.shape_cast %367 : vector<1x128xi1> to vector<1x128xi1>
    %369 = vector.broadcast %368 : vector<1x128xi1> to vector<2x128xi1>
    %370 = arith.select %369, %163, %166 : vector<2x128xi1>, vector<2x128xf32>
    %371 = vector.extract_strided_slice %370 {offsets = [0, 116], sizes = [2, 12], strides = [1, 1]} : vector<2x128xf32> to vector<2x12xf32>
    %372 = vector.extract_strided_slice %370 {offsets = [0, 0], sizes = [2, 116], strides = [1, 1]} : vector<2x128xf32> to vector<2x116xf32>
    %373 = tpu.concatenate %371, %372 in 1 : vector<2x12xf32>, vector<2x116xf32> -> vector<2x128xf32>
    %374 = arith.cmpf olt, %373, %163 : vector<2x128xf32>
    %375 = arith.cmpf oeq, %373, %163 : vector<2x128xf32>
    %c12_i32_46 = arith.constant 12 : i32
    %376 = vector.broadcast %c12_i32_46 : i32 to vector<1x128xi32>
    %377 = arith.cmpi sge, %38, %376 : vector<1x128xi32>
    %378 = vector.broadcast %377 : vector<1x128xi1> to vector<2x128xi1>
    %379 = arith.andi %375, %378 : vector<2x128xi1>
    %380 = arith.ori %374, %379 : vector<2x128xi1>
    %381 = arith.extui %380 : vector<2x128xi1> to vector<2x128xi32>
    %382 = arith.sitofp %381 : vector<2x128xi32> to vector<2x128xf32>
    %383 = arith.addf %365, %382 : vector<2x128xf32>
    %c3_i32_47 = arith.constant 3 : i32
    %384 = vector.broadcast %c3_i32_47 : i32 to vector<1x128xi32>
    %385 = arith.cmpi slt, %38, %384 : vector<1x128xi32>
    %386 = vector.shape_cast %385 : vector<1x128xi1> to vector<1x128xi1>
    %387 = vector.broadcast %386 : vector<1x128xi1> to vector<2x128xi1>
    %388 = arith.select %387, %163, %166 : vector<2x128xi1>, vector<2x128xf32>
    %389 = vector.extract_strided_slice %388 {offsets = [0, 115], sizes = [2, 13], strides = [1, 1]} : vector<2x128xf32> to vector<2x13xf32>
    %390 = vector.extract_strided_slice %388 {offsets = [0, 0], sizes = [2, 115], strides = [1, 1]} : vector<2x128xf32> to vector<2x115xf32>
    %391 = tpu.concatenate %389, %390 in 1 : vector<2x13xf32>, vector<2x115xf32> -> vector<2x128xf32>
    %392 = arith.cmpf olt, %391, %163 : vector<2x128xf32>
    %393 = arith.cmpf oeq, %391, %163 : vector<2x128xf32>
    %c13_i32_48 = arith.constant 13 : i32
    %394 = vector.broadcast %c13_i32_48 : i32 to vector<1x128xi32>
    %395 = arith.cmpi sge, %38, %394 : vector<1x128xi32>
    %396 = vector.broadcast %395 : vector<1x128xi1> to vector<2x128xi1>
    %397 = arith.andi %393, %396 : vector<2x128xi1>
    %398 = arith.ori %392, %397 : vector<2x128xi1>
    %399 = arith.extui %398 : vector<2x128xi1> to vector<2x128xi32>
    %400 = arith.sitofp %399 : vector<2x128xi32> to vector<2x128xf32>
    %401 = arith.addf %383, %400 : vector<2x128xf32>
    %c2_i32_49 = arith.constant 2 : i32
    %402 = vector.broadcast %c2_i32_49 : i32 to vector<1x128xi32>
    %403 = arith.cmpi slt, %38, %402 : vector<1x128xi32>
    %404 = vector.shape_cast %403 : vector<1x128xi1> to vector<1x128xi1>
    %405 = vector.broadcast %404 : vector<1x128xi1> to vector<2x128xi1>
    %406 = arith.select %405, %163, %166 : vector<2x128xi1>, vector<2x128xf32>
    %407 = vector.extract_strided_slice %406 {offsets = [0, 114], sizes = [2, 14], strides = [1, 1]} : vector<2x128xf32> to vector<2x14xf32>
    %408 = vector.extract_strided_slice %406 {offsets = [0, 0], sizes = [2, 114], strides = [1, 1]} : vector<2x128xf32> to vector<2x114xf32>
    %409 = tpu.concatenate %407, %408 in 1 : vector<2x14xf32>, vector<2x114xf32> -> vector<2x128xf32>
    %410 = arith.cmpf olt, %409, %163 : vector<2x128xf32>
    %411 = arith.cmpf oeq, %409, %163 : vector<2x128xf32>
    %c14_i32_50 = arith.constant 14 : i32
    %412 = vector.broadcast %c14_i32_50 : i32 to vector<1x128xi32>
    %413 = arith.cmpi sge, %38, %412 : vector<1x128xi32>
    %414 = vector.broadcast %413 : vector<1x128xi1> to vector<2x128xi1>
    %415 = arith.andi %411, %414 : vector<2x128xi1>
    %416 = arith.ori %410, %415 : vector<2x128xi1>
    %417 = arith.extui %416 : vector<2x128xi1> to vector<2x128xi32>
    %418 = arith.sitofp %417 : vector<2x128xi32> to vector<2x128xf32>
    %419 = arith.addf %401, %418 : vector<2x128xf32>
    %c1_i32_51 = arith.constant 1 : i32
    %420 = vector.broadcast %c1_i32_51 : i32 to vector<1x128xi32>
    %421 = arith.cmpi slt, %38, %420 : vector<1x128xi32>
    %422 = vector.shape_cast %421 : vector<1x128xi1> to vector<1x128xi1>
    %423 = vector.broadcast %422 : vector<1x128xi1> to vector<2x128xi1>
    %424 = arith.select %423, %163, %166 : vector<2x128xi1>, vector<2x128xf32>
    %425 = vector.extract_strided_slice %424 {offsets = [0, 113], sizes = [2, 15], strides = [1, 1]} : vector<2x128xf32> to vector<2x15xf32>
    %426 = vector.extract_strided_slice %424 {offsets = [0, 0], sizes = [2, 113], strides = [1, 1]} : vector<2x128xf32> to vector<2x113xf32>
    %427 = tpu.concatenate %425, %426 in 1 : vector<2x15xf32>, vector<2x113xf32> -> vector<2x128xf32>
    %428 = arith.cmpf olt, %427, %163 : vector<2x128xf32>
    %429 = arith.cmpf oeq, %427, %163 : vector<2x128xf32>
    %c15_i32_52 = arith.constant 15 : i32
    %430 = vector.broadcast %c15_i32_52 : i32 to vector<1x128xi32>
    %431 = arith.cmpi sge, %38, %430 : vector<1x128xi32>
    %432 = vector.broadcast %431 : vector<1x128xi1> to vector<2x128xi1>
    %433 = arith.andi %429, %432 : vector<2x128xi1>
    %434 = arith.ori %428, %433 : vector<2x128xi1>
    %435 = arith.extui %434 : vector<2x128xi1> to vector<2x128xi32>
    %436 = arith.sitofp %435 : vector<2x128xi32> to vector<2x128xf32>
    %437 = arith.addf %419, %436 : vector<2x128xf32>
    %438 = tpu.iota {dimensions = array<i32: 0>} : vector<16x128xi32>
    %439 = arith.fptosi %437 : vector<2x128xf32> to vector<2x128xi32>
    %440 = vector.extract_strided_slice %439 {offsets = [0, 0], sizes = [1, 128], strides = [1, 1]} : vector<2x128xi32> to vector<1x128xi32>
    %441 = vector.broadcast %440 : vector<1x128xi32> to vector<16x128xi32>
    %442 = arith.cmpi eq, %441, %438 : vector<16x128xi32>
    %443 = arith.extui %442 : vector<16x128xi1> to vector<16x128xi32>
    %444 = arith.sitofp %443 : vector<16x128xi32> to vector<16x128xf32>
    %445 = vector.extract_strided_slice %439 {offsets = [1, 0], sizes = [1, 128], strides = [1, 1]} : vector<2x128xi32> to vector<1x128xi32>
    %446 = vector.broadcast %445 : vector<1x128xi32> to vector<16x128xi32>
    %447 = arith.cmpi eq, %446, %438 : vector<16x128xi32>
    %448 = arith.extui %447 : vector<16x128xi1> to vector<16x128xi32>
    %449 = arith.sitofp %448 : vector<16x128xi32> to vector<16x128xf32>
    %450 = tpu.concatenate %444, %449 in 0 : vector<16x128xf32>, vector<16x128xf32> -> vector<32x128xf32>
    %451 = arith.truncf %450 : vector<32x128xf32> to vector<32x128xbf16>
    %452 = vector.extract_strided_slice %0 {offsets = [144, 0], sizes = [4, 32], strides = [1, 1]} : vector<152x72xbf16> to vector<4x32xbf16>
    %cst_53 = arith.constant dense<0.000000e+00> : vector<4x128xf32>
    %453 = tpu.matmul %452, %451, %cst_53 {dimension_numbers = #tpu.dot_dimension_numbers<[1], [0], [0], [1], [0, 0, 1, 1], [], []>} : vector<4x32xbf16>, vector<32x128xbf16>, vector<4x128xf32> -> vector<4x128xf32>
    %454 = vector.extract_strided_slice %163 {offsets = [0, 0], sizes = [1, 128], strides = [1, 1]} : vector<2x128xf32> to vector<1x128xf32>
    %455 = vector.extract_strided_slice %163 {offsets = [0, 0], sizes = [1, 128], strides = [1, 1]} : vector<2x128xf32> to vector<1x128xf32>
    %456 = vector.extract_strided_slice %163 {offsets = [1, 0], sizes = [1, 128], strides = [1, 1]} : vector<2x128xf32> to vector<1x128xf32>
    %457 = vector.extract_strided_slice %163 {offsets = [1, 0], sizes = [1, 128], strides = [1, 1]} : vector<2x128xf32> to vector<1x128xf32>
    %458 = tpu.concatenate %454, %455, %456, %457 in 0 : vector<1x128xf32>, vector<1x128xf32>, vector<1x128xf32>, vector<1x128xf32> -> vector<4x128xf32>
    %459 = arith.mulf %453, %458 : vector<4x128xf32>
    %460 = arith.truncf %459 : vector<4x128xf32> to vector<4x128xbf16>
    %cst_54 = arith.constant dense<0.000000e+00> : vector<4x8xf32>
    %461 = tpu.matmul %460, %2, %cst_54 {dimension_numbers = #tpu.dot_dimension_numbers<[1], [0], [0], [1], [0, 0, 1, 1], [], []>} : vector<4x128xbf16>, vector<128x8xbf16>, vector<4x8xf32> -> vector<4x8xf32>
    %462 = vector.extract_strided_slice %1 {offsets = [144, 0], sizes = [4, 1], strides = [1, 1]} : vector<152x1xf32> to vector<4x1xf32>
    %463 = vector.broadcast %462 : vector<4x1xf32> to vector<4x8xf32>
    %464 = arith.addf %461, %463 : vector<4x8xf32>
    %c0_55 = arith.constant 0 : index
    %c0_56 = arith.constant 0 : index
    %c0_57 = arith.constant 0 : index
    %465 = vector.load %arg6[%c0_55, %c0_56, %c0_57] : memref<1x4x8xf32, #tpu.memory_space<vmem>>, vector<1x4x8xf32>
    %466 = vector.shape_cast %465 : vector<1x4x8xf32> to vector<4x8xf32>
    %467 = vector.shape_cast %464 : vector<4x8xf32> to vector<1x4x8xf32>
    tpu.vector_store %arg6[%c0_55, %c0_56, %c0_57], %467 {strides = array<i32>} : memref<1x4x8xf32, #tpu.memory_space<vmem>>, vector<1x4x8xf32>,
    return
  }
  func.func @transform_0(%arg0: i32) -> (i32, i32) {
    %c0_i32 = arith.constant 0 : i32
    %c0_i32_0 = arith.constant 0 : i32
    return %c0_i32, %arg0 : i32, i32
  }
  func.func @transform_1(%arg0: i32) -> (i32, i32) {
    %c0_i32 = arith.constant 0 : i32
    %c0_i32_0 = arith.constant 0 : i32
    %c0_i32_1 = arith.constant 0 : i32
    return %c0_i32, %c0_i32_0 : i32, i32
  }
  func.func @transform_2(%arg0: i32) -> (i32, i32) {
    %c0_i32 = arith.constant 0 : i32
    %c0_i32_0 = arith.constant 0 : i32
    %c0_i32_1 = arith.constant 0 : i32
    return %c0_i32, %c0_i32_0 : i32, i32
  }
  func.func @transform_3(%arg0: i32) -> (i32, i32) {
    %c0_i32 = arith.constant 0 : i32
    %c0_i32_0 = arith.constant 0 : i32
    %c0_i32_1 = arith.constant 0 : i32
    return %c0_i32, %c0_i32_0 : i32, i32
  }
  func.func @transform_4(%arg0: i32) -> (i32, i32) {
    %c0_i32 = arith.constant 0 : i32
    %c0_i32_0 = arith.constant 0 : i32
    return %c0_i32, %arg0 : i32, i32
  }
  func.func @transform_5(%arg0: i32) -> (i32, i32, i32) {
    %c0_i32 = arith.constant 0 : i32
    %c0_i32_0 = arith.constant 0 : i32
    %c0_i32_1 = arith.constant 0 : i32
    return %arg0, %c0_i32, %c0_i32_0 : i32, i32, i32
  }
}

</mosaic_0001>

<llo_original>
// kernel: tpu_custom_call.1
$region0: #{tpu_custom_call.1}
  #allocation0 [shape = 'u32[]', space=smem, size = 0x4, offset = 0x4, fixed_abs, tag = 'smem constant byte address 0x4 - core index']
  #allocation1 [shape = 'u32[144,128]{1,0:T(1,128)}', space=vmem, size = 0x12000, scoped, tag = 'internal scratch']
  %s0 = inlined_call_operand.hbm [shape: f32[8,256], index: 0, kind: input, shape index: {}]
  %s1 = inlined_call_operand.hbm [shape: f32[8,256], index: 1, kind: output, shape index: {}]
  %s2 = sld [smem:[#allocation0]]
  $region18: #{tpu_custom_call.1} parent=0
    _
  %s4 = ssub.s32 1, %s2
  %s5 = scalar_select 0, %s4, %s2
  $region1: #{tpu_custom_call.1} parent=0
    #allocation2 [shape = 'u8[8192]{0}', space=vmem, size = 0x2000, scoped, tag = 'input window, operand 0, single buffered']
    #allocation3 [shape = 's32[1]{0}', space=sflag, size = 0x4, scoped, tag = 'scoped memory for tpu_custom_call.1']
    #allocation4 [shape = 's32[1]{0}', space=sflag, size = 0x4, scoped, tag = 'scoped memory for tpu_custom_call.1']
    #allocation5 [shape = 'u8[8192]{0}', space=vmem, size = 0x2000, scoped, tag = 'output window, operand 0, single buffered']
    %6 = vsyncpa [#allocation3], 0
    %7 = vsyncpa [#allocation4], 0
    // Predicated region
    $region2: #{tpu_custom_call.1} parent=1 // pred_check
      _
    $region3: #{tpu_custom_call.1} parent=1 // pred_check_branch
      %9 = sbr.rel (0) target = $region5
    $region4: #{tpu_custom_call.1} parent=1 // pred_region
      %s11 = ssub.s32 256, 256
      %12 = vsyncadd [#allocation3], %s11
      %s14 = sshll.u32 [#allocation2], 4
      %s15 = int_to_ptr.vmem [resolvable:$true] %s14
      %17 = dma.hbm_to_vmem [thread:$0]  %s0, 256, %s15, [#allocation3]
    $region5: #{tpu_custom_call.1} parent=1 // pred_fallthru
      _
    // Predicated region
    $region6: #{tpu_custom_call.1} parent=1 // pred_check
      _
    $region7: #{tpu_custom_call.1} parent=1 // pred_check_branch
      %19 = sbr.rel (0) target = $region9
    $region8: #{tpu_custom_call.1} parent=1 // pred_region
      %20 = dma.done [#allocation3], 256
    $region9: #{tpu_custom_call.1} parent=1 // pred_fallthru
      _
    %v21 = vld [vmem:[#allocation2] sm:$0xff]
    %v22 = vld [vmem:[#allocation2 + $0x8] sm:$0xff]
    %23 = vrot.lane.b32.xlu0 %v21, 5
    %v24 = vpop.permute.xlu0 %23
    %25 = vrot.lane.b32.xlu0 %v22, 5
    %v26 = vpop.permute.xlu0 %25
    %v27 = vlaneseq
    %v28 = vand.u32 %v27, 127
    %vm29 = vcmp.lt.s32.totalorder %v28, 5
    %v30 = vsel %vm29, %v24, %v26
    %v31 = vsel %vm29, %v26, %v24
    %32 = vst [vmem:[#allocation5] sm:$0xff] %v31
    %33 = vst [vmem:[#allocation5 + $0x8] sm:$0xff] %v30
    // Predicated region
    $region10: #{tpu_custom_call.1} parent=1 // pred_check
      _
    $region11: #{tpu_custom_call.1} parent=1 // pred_check_branch
      %35 = sbr.rel (0) target = $region13
    $region12: #{tpu_custom_call.1} parent=1 // pred_region
      %s37 = ssub.s32 256, 256
      %38 = vsyncadd [#allocation4], %s37
      %s40 = sshll.u32 [#allocation5], 4
      %s41 = int_to_ptr.vmem [resolvable:$true] %s40
      %43 = dma.vmem_to_hbm [thread:$0]  %s41, 256, %s1, [#allocation4]
    $region13: #{tpu_custom_call.1} parent=1 // pred_fallthru
      _
    // Predicated region
    $region14: #{tpu_custom_call.1} parent=1 // pred_check
      _
    $region15: #{tpu_custom_call.1} parent=1 // pred_check_branch
      %45 = sbr.rel (0) target = $region17
    $region16: #{tpu_custom_call.1} parent=1 // pred_region
      %46 = dma.done [#allocation4], 256
    $region17: #{tpu_custom_call.1} parent=1 // pred_fallthru
      _
    %47 = vsyncpa [#allocation3], 1
    %48 = vsyncpa [#allocation4], 1

// kernel: network_forward.1
$region0: #{network_forward.1}
  #allocation0 [shape = 'u32[]', space=smem, size = 0x4, offset = 0x4, fixed_abs, tag = 'smem constant byte address 0x4 - core index']
  #allocation1 [shape = 'u32[144,128]{1,0:T(1,128)}', space=vmem, size = 0x12000, scoped, tag = 'internal scratch']
  %s0 = inlined_call_operand.vmem [shape: s32[2,128], index: 0, kind: input, shape index: {}]
  %s1 = inlined_call_operand.vmem [shape: bf16[152,72], index: 1, kind: input, shape index: {}]
  %s2 = inlined_call_operand.vmem [shape: f32[152,1], index: 2, kind: input, shape index: {}]
  %s3 = inlined_call_operand.vmem [shape: bf16[128,8], index: 3, kind: input, shape index: {}]
  %s4 = inlined_call_operand.vmem [shape: f32[4,128], index: 4, kind: output, shape index: {0}]
  %s5 = inlined_call_operand.vmem [shape: f32[1,4,8], index: 5, kind: output, shape index: {1}]
  %6 = xla_tuple %s4, %s5
  %s7 = sld [smem:[#allocation0]]
  $region34: #{network_forward.1} parent=0
    _
  %s9 = ssub.s32 1, %s7
  %s10 = scalar_select 0, %s9, %s7
  // Predicated region
  $region2: #{network_forward.1} parent=0 // pred_check
    _
  $region3: #{network_forward.1} parent=0 // pred_check_branch
    %12 = sbr.rel (0) target = $region5
  $region4: #{network_forward.1} parent=0 // pred_region
    _
  $region5: #{network_forward.1} parent=0 // pred_fallthru
    _
  // Predicated region
  $region6: #{network_forward.1} parent=0 // pred_check
    _
  $region7: #{network_forward.1} parent=0 // pred_check_branch
    %14 = sbr.rel (0) target = $region9
  $region8: #{network_forward.1} parent=0 // pred_region
    _
  $region9: #{network_forward.1} parent=0 // pred_fallthru
    _
  // Predicated region
  $region10: #{network_forward.1} parent=0 // pred_check
    _
  $region11: #{network_forward.1} parent=0 // pred_check_branch
    %16 = sbr.rel (0) target = $region13
  $region12: #{network_forward.1} parent=0 // pred_region
    _
  $region13: #{network_forward.1} parent=0 // pred_fallthru
    _
  // Predicated region
  $region14: #{network_forward.1} parent=0 // pred_check
    _
  $region15: #{network_forward.1} parent=0 // pred_check_branch
    %18 = sbr.rel (0) target = $region17
  $region16: #{network_forward.1} parent=0 // pred_region
    _
  $region17: #{network_forward.1} parent=0 // pred_fallthru
    _
  %v20 = vld [vmem:[%s1] sm:$0xf]
  %v21 = vld [vmem:[%s1 + $0x4] sm:$0xf]
  %v22 = vld [vmem:[%s1 + $0x8] sm:$0xf]
  %v23 = vld [vmem:[%s1 + $0xc] sm:$0xf]
  %v24 = vld [vmem:[%s1 + $0x10] sm:$0xf]
  %v25 = vld [vmem:[%s1 + $0x14] sm:$0xf]
  %v26 = vld [vmem:[%s1 + $0x18] sm:$0xf]
  %v27 = vld [vmem:[%s1 + $0x1c] sm:$0xf]
  %v28 = vld [vmem:[%s1 + $0x20] sm:$0xf]
  %v29 = vld [vmem:[%s1 + $0x24] sm:$0xf]
  %v30 = vld [vmem:[%s1 + $0x28] sm:$0xf]
  %v31 = vld [vmem:[%s1 + $0x2c] sm:$0xf]
  %v32 = vld [vmem:[%s1 + $0x30] sm:$0xf]
  %v33 = vld [vmem:[%s1 + $0x34] sm:$0xf]
  %v34 = vld [vmem:[%s1 + $0x38] sm:$0xf]
  %v35 = vld [vmem:[%s1 + $0x3c] sm:$0xf]
  %v36 = vld [vmem:[%s1 + $0x40] sm:$0xf]
  %v37 = vld [vmem:[%s1 + $0x44] sm:$0xf]
  %v38 = vld [vmem:[%s1 + $0x48] sm:$0xf]
  %v39 = vld [vmem:[%s2] sm:$0xff]
  %v40 = vld [vmem:[%s2 + $0x8] sm:$0xff]
  %v41 = vld [vmem:[%s2 + $0x10] sm:$0xff]
  %v42 = vld [vmem:[%s2 + $0x18] sm:$0xff]
  %v43 = vld [vmem:[%s2 + $0x20] sm:$0xff]
  %v44 = vld [vmem:[%s2 + $0x28] sm:$0xff]
  %v45 = vld [vmem:[%s2 + $0x30] sm:$0xff]
  %v46 = vld [vmem:[%s2 + $0x38] sm:$0xff]
  %v47 = vld [vmem:[%s2 + $0x50] sm:$0xff]
  %v48 = vld [vmem:[%s2 + $0x58] sm:$0xff]
  %v49 = vld [vmem:[%s2 + $0x60] sm:$0xff]
  %v50 = vld [vmem:[%s2 + $0x68] sm:$0xff]
  %v51 = vld [vmem:[%s2 + $0x70] sm:$0xff]
  %v52 = vld [vmem:[%s2 + $0x78] sm:$0xff]
  %v53 = vld [vmem:[%s2 + $0x80] sm:$0xff]
  %v54 = vld [vmem:[%s2 + $0x88] sm:$0xff]
  %v55 = vld [vmem:[%s2 + $0x90] sm:$0xff]
  %v56 = vld [vmem:[%s3] sm:$0xf]
  %v57 = vld [vmem:[%s3 + $0x4] sm:$0xf]
  %v58 = vld [vmem:[%s3 + $0x8] sm:$0xf]
  %v59 = vld [vmem:[%s3 + $0xc] sm:$0xf]
  %v60 = vld [vmem:[%s3 + $0x10] sm:$0xf]
  %v61 = vld [vmem:[%s3 + $0x14] sm:$0xf]
  %v62 = vld [vmem:[%s3 + $0x18] sm:$0xf]
  %v63 = vld [vmem:[%s3 + $0x1c] sm:$0xf]
  %v64 = vld [vmem:[%s3 + $0x20] sm:$0xf]
  %v65 = vld [vmem:[%s3 + $0x24] sm:$0xf]
  %v66 = vld [vmem:[%s3 + $0x28] sm:$0xf]
  %v67 = vld [vmem:[%s3 + $0x2c] sm:$0xf]
  %v68 = vld [vmem:[%s3 + $0x30] sm:$0xf]
  %v69 = vld [vmem:[%s3 + $0x34] sm:$0xf]
  %v70 = vld [vmem:[%s3 + $0x38] sm:$0xf]
  %v71 = vld [vmem:[%s3 + $0x3c] sm:$0xf]
  %v72 = vld [vmem:[%s0] sm:$0x3]
  %vm73 = vcmp.eq.s32.totalorder %v72, 1
  %v74 = vsel %vm73, 1, 0
  %v75 = vcvt.s32.f32 %v74
  %vm76 = vcmp.eq.s32.totalorder %v72, 2
  %v77 = vsel %vm76, 1, 0
  %v78 = vcvt.s32.f32 %v77
  %vm79 = vcmp.eq.s32.totalorder %v72, 3
  %v80 = vsel %vm79, 1, 0
  %v81 = vcvt.s32.f32 %v80
  %vm82 = vcmp.eq.s32.totalorder %v72, 0
  %v83 = vsel %vm82, 1, 0
  %v84 = vcvt.s32.f32 %v83
  %v86 = vrot.slane %v78, 7
  %v89 = vrot.slane %v81, 6
  %v92 = vrot.slane %v84, 6
  %v95 = vrot.slane %v75, 5
  %v97 = vrot.slane %v78, 4
  %v99 = vrot.slane %v81, 3
  %vm101 = vcmask 1040384
  %v102 = vsel %vm101, %v75, %v86
  %vm103 = vcmask 1041408
  %v104 = vsel %vm103, %v102, %v89
  %vm105 = vcmask 1042432
  %v106 = vsel %vm105, %v104, %v92
  %vm107 = vcmask 1043456
  %v108 = vsel %vm107, %v106, %v95
  %vm109 = vcmask 1044480
  %v110 = vsel %vm109, %v108, %v97
  %vm111 = vcmask 1045504
  %v112 = vsel %vm111, %v110, %v99
  %vm113 = vcmask 1046528
  %v114 = vsel %vm113, %v112, 0.0
  %v115 = vlaneseq
  %v116 = vand.u32 %v115, 127
  %v117 = vand.u32 %v116, 15
  %v118 = vshra.s32 %v117, 2
  %v119 = vand.u32 %v117, 3
  %121 = vrot.lane.b32.xlu0 %v114, 5
  %v122 = vpop.permute.xlu0 %121
  %vm124 = vcmp.ge.s32.totalorder %v118, 1
  %vm125 = vcmp.ge.s32.totalorder %v119, 1
  %vm126 = vmand %vm124, %vm125
  %v127 = vsel %vm126, 1, 0
  %v128 = vcvt.s32.f32 %v127
  %v129 = vmul.f32 %v122, %v128
  %130 = vrot.lane.b32.xlu0 %v114, 4
  %v131 = vpop.permute.xlu0 %130
  %v133 = vsel %vm124, 1, 0
  %v134 = vcvt.s32.f32 %v133
  %v135 = vmul.f32 %v131, %v134
  %136 = vrot.lane.b32.xlu0 %v114, 3
  %v137 = vpop.permute.xlu0 %136
  %vm139 = vcmp.le.s32.totalorder %v119, 2
  %vm140 = vmand %vm124, %vm139
  %v141 = vsel %vm140, 1, 0
  %v142 = vcvt.s32.f32 %v141
  %v143 = vmul.f32 %v137, %v142
  %144 = vrot.lane.b32.xlu0 %v114, 1
  %v145 = vpop.permute.xlu0 %144
  %v147 = vsel %vm125, 1, 0
  %v148 = vcvt.s32.f32 %v147
  %v149 = vmul.f32 %v145, %v148
  %150 = vrot.lane.b32.xlu0 %v114, 127
  %v151 = vpop.permute.xlu0 %150
  %v153 = vsel %vm139, 1, 0
  %v154 = vcvt.s32.f32 %v153
  %v155 = vmul.f32 %v151, %v154
  %156 = vrot.lane.b32.xlu0 %v114, 125
  %v157 = vpop.permute.xlu0 %156
  %vm159 = vcmp.le.s32.totalorder %v118, 2
  %vm160 = vmand %vm159, %vm125
  %v161 = vsel %vm160, 1, 0
  %v162 = vcvt.s32.f32 %v161
  %v163 = vmul.f32 %v157, %v162
  %164 = vrot.lane.b32.xlu0 %v114, 124
  %v165 = vpop.permute.xlu0 %164
  %v167 = vsel %vm159, 1, 0
  %v168 = vcvt.s32.f32 %v167
  %v169 = vmul.f32 %v165, %v168
  %170 = vrot.lane.b32.xlu0 %v114, 123
  %v171 = vpop.permute.xlu0 %170
  %vm173 = vmand %vm159, %vm139
  %v174 = vsel %vm173, 1, 0
  %v175 = vcvt.s32.f32 %v174
  %v176 = vmul.f32 %v171, %v175
  %v177 = vpack.c.bf16 %v135, %v129
  %v178 = vpack.c.bf16 %v149, %v143
  %v179 = vpack.c.bf16 %v155, %v114
  %v180 = vpack.c.bf16 %v169, %v163
  %v181 = vpack.c.bf16 %v176, %v176
  %v192 = vunpack.c.l.b16 %v20
  %v193 = vunpack.c.l.b16 %v21
  %v194 = vunpack.c.l.b16 %v22
  %v195 = vunpack.c.l.b16 %v23
  %v196 = vunpack.c.l.b16 %v24
  %v197 = vunpack.c.l.b16 %v25
  %v198 = vunpack.c.l.b16 %v26
  %v199 = vunpack.c.l.b16 %v27
  %v200 = vunpack.c.l.b16 %v28
  %v201 = vunpack.c.l.b16 %v29
  %v202 = vpack.c.b16 %v193, %v192
  %v203 = vpack.c.b16 %v195, %v194
  %v204 = vpack.c.b16 %v197, %v196
  %v205 = vpack.c.b16 %v199, %v198
  %v206 = vpack.c.b16 %v201, %v200
  %vm207 = vcmask 588800
  %v209 = vsel %vm207, %v202, 0
  %v212 = vsel %vm207, %v203, 0
  %v215 = vsel %vm207, %v204, 0
  %v218 = vsel %vm207, %v205, 0
  %v221 = vsel %vm207, %v206, 0
  %v224 = vsel %vm107, %v181, 0
  %226 = vmatprep.subr.bf16.mxu0 0
  %227 = vmatpush1.bf16.msra.mxu0 0
  %228 = vmatprep.subr.bf16.mxu0 0
  %229 = vmatpush1.bf16.msra.mxu0 0
  %230 = vmatprep.subr.bf16.mxu0 0
  %231 = vmatpush1.bf16.msra.mxu0 0
  %232 = vmatprep.subr.bf16.mxu0 0
  %233 = vmatpush1.bf16.msra.mxu0 %v224
  %234 = vmatprep.subr.bf16.mxu0 0
  %235 = vmatpush1.bf16.msra.mxu0 %v180
  %236 = vmatprep.subr.bf16.mxu0 0
  %237 = vmatpush1.bf16.msra.mxu0 %v179
  %238 = vmatprep.subr.bf16.mxu0 0
  %239 = vmatpush1.bf16.msra.mxu0 %v178
  %240 = vmatprep.subr.bf16.mxu0 0
  %241 = vmatpush1.bf16.msra.mxu0 %v177
  %242 = vmatprep.subr.bf16.mxu0 0
  %243 = vmatpush2.bf16.msra.mxu0 0
  %244 = vmatprep.subr.bf16.mxu0 0
  %245 = vmatpush2.bf16.msra.mxu0 0
  %246 = vmatprep.subr.bf16.mxu0 0
  %247 = vmatpush2.bf16.msra.mxu0 0
  %248 = vmatprep.subr.bf16.mxu0 0
  %249 = vmatpush2.bf16.msra.mxu0 0
  %250 = vmatprep.subr.bf16.mxu0 0
  %251 = vmatpush2.bf16.msra.mxu0 0
  %252 = vmatprep.subr.bf16.mxu0 0
  %253 = vmatpush2.bf16.msra.mxu0 0
  %254 = vmatprep.subr.bf16.mxu0 0
  %255 = vmatpush2.bf16.msra.mxu0 0
  %256 = vmatprep.subr.bf16.mxu0 0
  %257 = vmatpush2.bf16.msra.mxu0 0
  %258 = vmatprep.mubr.bf16.mxu0 0
  %259 = vmatmul.mubr.bf16.gmra.mxu0 %v209
  %v260 = vpop.f32.mrf.mxu0
  %v261 = vadd.f32 0.0, %v260
  %v262 = vpop.f32.mrf.mxu0
  %v263 = vpop.f32.mrf.mxu0
  %v264 = vadd.f32 0.0, %v263
  %v265 = vpop.f32.mrf.mxu0
  %266 = vmatprep.mubr.bf16.mxu0 0
  %267 = vmatmul.mubr.bf16.gmra.mxu0 %v212
  %v268 = vpop.f32.mrf.mxu0
  %v269 = vadd.f32 0.0, %v268
  %v270 = vpop.f32.mrf.mxu0
  %v271 = vpop.f32.mrf.mxu0
  %v272 = vadd.f32 0.0, %v271
  %v273 = vpop.f32.mrf.mxu0
  %274 = vmatprep.mubr.bf16.mxu0 0
  %275 = vmatmul.mubr.bf16.gmra.mxu0 %v215
  %v276 = vpop.f32.mrf.mxu0
  %v277 = vadd.f32 0.0, %v276
  %v278 = vpop.f32.mrf.mxu0
  %v279 = vpop.f32.mrf.mxu0
  %v280 = vadd.f32 0.0, %v279
  %v281 = vpop.f32.mrf.mxu0
  %282 = vmatprep.mubr.bf16.mxu0 0
  %283 = vmatmul.mubr.bf16.gmra.mxu0 %v218
  %v284 = vpop.f32.mrf.mxu0
  %v285 = vadd.f32 0.0, %v284
  %v286 = vpop.f32.mrf.mxu0
  %v287 = vpop.f32.mrf.mxu0
  %v288 = vadd.f32 0.0, %v287
  %v289 = vpop.f32.mrf.mxu0
  %290 = vmatprep.mubr.bf16.mxu0 0
  %291 = vmatmul.mubr.bf16.gmra.mxu0 %v221
  %v292 = vpop.f32.mrf.mxu0
  %v293 = vadd.f32 0.0, %v292
  %v294 = vpop.f32.mrf.mxu0
  %v295 = vpop.f32.mrf.mxu0
  %v296 = vadd.f32 0.0, %v295
  %v297 = vpop.f32.mrf.mxu0
  %298 = vdwg.mxu0
  %300 = vset.pattern.permute.xlu0 0
  %301 = vperm.xlu0 %300, %v39
  %v302 = vpop.permute.xlu0 %301
  %305 = vset.pattern.permute.xlu0 0
  %306 = vperm.xlu0 %305, %v40
  %v307 = vpop.permute.xlu0 %306
  %310 = vset.pattern.permute.xlu0 0
  %311 = vperm.xlu0 %310, %v41
  %v312 = vpop.permute.xlu0 %311
  %315 = vset.pattern.permute.xlu0 0
  %316 = vperm.xlu0 %315, %v42
  %v317 = vpop.permute.xlu0 %316
  %320 = vset.pattern.permute.xlu0 0
  %321 = vperm.xlu0 %320, %v43
  %v322 = vpop.permute.xlu0 %321
  %325 = vset.pattern.permute.xlu0 0
  %326 = vperm.xlu0 %325, %v44
  %v327 = vpop.permute.xlu0 %326
  %330 = vset.pattern.permute.xlu0 0
  %331 = vperm.xlu0 %330, %v45
  %v332 = vpop.permute.xlu0 %331
  %335 = vset.pattern.permute.xlu0 0
  %336 = vperm.xlu0 %335, %v46
  %v337 = vpop.permute.xlu0 %336
  %v339 = vadd.f32 %v261, %v302
  %v340 = vadd.f32 %v264, %v307
  %v341 = vadd.f32 %v269, %v312
  %v342 = vadd.f32 %v272, %v317
  %v343 = vadd.f32 %v277, %v322
  %v344 = vadd.f32 %v280, %v327
  %v345 = vadd.f32 %v285, %v332
  %v346 = vadd.f32 %v288, %v337
  %v347 = vmax.f32 %v339, 0.0
  %v348 = vmax.f32 %v340, 0.0
  %v349 = vmax.f32 %v341, 0.0
  %v350 = vmax.f32 %v342, 0.0
  %v351 = vmax.f32 %v343, 0.0
  %v352 = vmax.f32 %v344, 0.0
  %v353 = vmax.f32 %v345, 0.0
  %v354 = vmax.f32 %v346, 0.0
  %v355 = vpack.c.bf16 %v348, %v347
  %v356 = vpack.c.bf16 %v350, %v349
  %v357 = vpack.c.bf16 %v352, %v351
  %v358 = vpack.c.bf16 %v354, %v353
  %360 = vset.pattern.permute.xlu0 0
  %361 = vperm.xlu0 %360, %v47
  %v362 = vpop.permute.xlu0 %361
  %365 = vset.pattern.permute.xlu0 0
  %366 = vperm.xlu0 %365, %v48
  %v367 = vpop.permute.xlu0 %366
  %370 = vset.pattern.permute.xlu0 0
  %371 = vperm.xlu0 %370, %v49
  %v372 = vpop.permute.xlu0 %371
  %375 = vset.pattern.permute.xlu0 0
  %376 = vperm.xlu0 %375, %v50
  %v377 = vpop.permute.xlu0 %376
  %v383 = vunpack.c.l.b16 %v30
  %v384 = vunpack.c.l.b16 %v31
  %v385 = vunpack.c.l.b16 %v32
  %v386 = vunpack.c.l.b16 %v33
  %v387 = vpack.c.b16 %v384, %v383
  %v388 = vpack.c.b16 %v386, %v385
  %vm389 = vcmask 523264
  %v391 = vsel %vm389, %v387, 0
  %v394 = vsel %vm389, %v388, 0
  %396 = vmatprep.subr.bf16.mxu0 0
  %397 = vmatpush1.bf16.msra.mxu0 0
  %398 = vmatprep.subr.bf16.mxu0 0
  %399 = vmatpush1.bf16.msra.mxu0 0
  %400 = vmatprep.subr.bf16.mxu0 0
  %401 = vmatpush1.bf16.msra.mxu0 0
  %402 = vmatprep.subr.bf16.mxu0 0
  %403 = vmatpush1.bf16.msra.mxu0 0
  %404 = vmatprep.subr.bf16.mxu0 0
  %405 = vmatpush1.bf16.msra.mxu0 %v358
  %406 = vmatprep.subr.bf16.mxu0 0
  %407 = vmatpush1.bf16.msra.mxu0 %v357
  %408 = vmatprep.subr.bf16.mxu0 0
  %409 = vmatpush1.bf16.msra.mxu0 %v356
  %410 = vmatprep.subr.bf16.mxu0 0
  %411 = vmatpush1.bf16.msra.mxu0 %v355
  %412 = vmatprep.subr.bf16.mxu0 0
  %413 = vmatpush2.bf16.msra.mxu0 0
  %414 = vmatprep.subr.bf16.mxu0 0
  %415 = vmatpush2.bf16.msra.mxu0 0
  %416 = vmatprep.subr.bf16.mxu0 0
  %417 = vmatpush2.bf16.msra.mxu0 0
  %418 = vmatprep.subr.bf16.mxu0 0
  %419 = vmatpush2.bf16.msra.mxu0 0
  %420 = vmatprep.subr.bf16.mxu0 0
  %421 = vmatpush2.bf16.msra.mxu0 0
  %422 = vmatprep.subr.bf16.mxu0 0
  %423 = vmatpush2.bf16.msra.mxu0 0
  %424 = vmatprep.subr.bf16.mxu0 0
  %425 = vmatpush2.bf16.msra.mxu0 0
  %426 = vmatprep.subr.bf16.mxu0 0
  %427 = vmatpush2.bf16.msra.mxu0 0
  %428 = vmatprep.mubr.bf16.mxu0 0
  %429 = vmatmul.mubr.bf16.gmra.mxu0 %v391
  %v430 = vpop.f32.mrf.mxu0
  %v431 = vadd.f32 %v362, %v430
  %v432 = vpop.f32.mrf.mxu0
  %v433 = vpop.f32.mrf.mxu0
  %v434 = vadd.f32 %v367, %v433
  %v435 = vpop.f32.mrf.mxu0
  %436 = vmatprep.mubr.bf16.mxu0 0
  %437 = vmatmul.mubr.bf16.gmra.mxu0 %v394
  %v438 = vpop.f32.mrf.mxu0
  %v439 = vadd.f32 %v372, %v438
  %v440 = vpop.f32.mrf.mxu0
  %v441 = vpop.f32.mrf.mxu0
  %v442 = vadd.f32 %v377, %v441
  %v443 = vpop.f32.mrf.mxu0
  %444 = vdwg.mxu0
  %v445 = vmax.f32 %v431, 0.0
  %v446 = vmax.f32 %v434, 0.0
  %v447 = vmax.f32 %v439, 0.0
  %v448 = vmax.f32 %v442, 0.0
  %v449 = vpack.c.bf16 %v446, %v445
  %v450 = vpack.c.bf16 %v448, %v447
  %452 = vset.pattern.permute.xlu0 0
  %453 = vperm.xlu0 %452, %v51
  %v454 = vpop.permute.xlu0 %453
  %457 = vset.pattern.permute.xlu0 0
  %458 = vperm.xlu0 %457, %v52
  %v459 = vpop.permute.xlu0 %458
  %462 = vset.pattern.permute.xlu0 0
  %463 = vperm.xlu0 %462, %v53
  %v464 = vpop.permute.xlu0 %463
  %v469 = vunpack.c.l.b16 %v34
  %v470 = vunpack.c.l.b16 %v35
  %v471 = vunpack.c.l.b16 %v36
  %v472 = vpack.c.b16 %v470, %v469
  %v473 = vpack.c.b16 %v471, %v471
  %vm474 = vcmask 261120
  %v476 = vsel %vm474, %v472, 0
  %v479 = vsel %vm474, %v473, 0
  %481 = vmatprep.subr.bf16.mxu0 0
  %482 = vmatpush1.bf16.msra.mxu0 0
  %483 = vmatprep.subr.bf16.mxu0 0
  %484 = vmatpush1.bf16.msra.mxu0 0
  %485 = vmatprep.subr.bf16.mxu0 0
  %486 = vmatpush1.bf16.msra.mxu0 0
  %487 = vmatprep.subr.bf16.mxu0 0
  %488 = vmatpush1.bf16.msra.mxu0 0
  %489 = vmatprep.subr.bf16.mxu0 0
  %490 = vmatpush1.bf16.msra.mxu0 0
  %491 = vmatprep.subr.bf16.mxu0 0
  %492 = vmatpush1.bf16.msra.mxu0 0
  %493 = vmatprep.subr.bf16.mxu0 0
  %494 = vmatpush1.bf16.msra.mxu0 %v450
  %495 = vmatprep.subr.bf16.mxu0 0
  %496 = vmatpush1.bf16.msra.mxu0 %v449
  %497 = vmatprep.subr.bf16.mxu0 0
  %498 = vmatpush2.bf16.msra.mxu0 0
  %499 = vmatprep.subr.bf16.mxu0 0
  %500 = vmatpush2.bf16.msra.mxu0 0
  %501 = vmatprep.subr.bf16.mxu0 0
  %502 = vmatpush2.bf16.msra.mxu0 0
  %503 = vmatprep.subr.bf16.mxu0 0
  %504 = vmatpush2.bf16.msra.mxu0 0
  %505 = vmatprep.subr.bf16.mxu0 0
  %506 = vmatpush2.bf16.msra.mxu0 0
  %507 = vmatprep.subr.bf16.mxu0 0
  %508 = vmatpush2.bf16.msra.mxu0 0
  %509 = vmatprep.subr.bf16.mxu0 0
  %510 = vmatpush2.bf16.msra.mxu0 0
  %511 = vmatprep.subr.bf16.mxu0 0
  %512 = vmatpush2.bf16.msra.mxu0 0
  %513 = vmatprep.mubr.bf16.mxu0 0
  %514 = vmatmul.mubr.bf16.gmra.mxu0 %v476
  %v515 = vpop.f32.mrf.mxu0
  %v516 = vadd.f32 %v454, %v515
  %v517 = vpop.f32.mrf.mxu0
  %v518 = vpop.f32.mrf.mxu0
  %v519 = vadd.f32 %v459, %v518
  %v520 = vpop.f32.mrf.mxu0
  %521 = vmatprep.mubr.bf16.mxu0 0
  %522 = vmatmul.mubr.bf16.gmra.mxu0 %v479
  %v523 = vpop.f32.mrf.mxu0
  %v524 = vadd.f32 %v464, %v523
  %v525 = vpop.f32.mrf.mxu0
  %v526 = vpop.f32.mrf.mxu0
  %v527 = vpop.f32.mrf.mxu0
  %528 = vdwg.mxu0
  %v529 = vadd.f32 %v516, %v293
  %v530 = vadd.f32 %v519, %v296
  %v531 = vmax.f32 %v529, 0.0
  %v532 = vmax.f32 %v530, 0.0
  %v533 = vpack.c.bf16 %v532, %v531
  %535 = vset.pattern.permute.xlu0 0
  %536 = vperm.xlu0 %535, %v54
  %v537 = vpop.permute.xlu0 %536
  %vm539 = vcmask 130048
  %v541 = vsel %vm539, %v37, 0
  %543 = vmatprep.subr.bf16.mxu0 0
  %544 = vmatpush1.bf16.msra.mxu0 0
  %545 = vmatprep.subr.bf16.mxu0 0
  %546 = vmatpush1.bf16.msra.mxu0 0
  %547 = vmatprep.subr.bf16.mxu0 0
  %548 = vmatpush1.bf16.msra.mxu0 0
  %549 = vmatprep.subr.bf16.mxu0 0
  %550 = vmatpush1.bf16.msra.mxu0 0
  %551 = vmatprep.subr.bf16.mxu0 0
  %552 = vmatpush1.bf16.msra.mxu0 0
  %553 = vmatprep.subr.bf16.mxu0 0
  %554 = vmatpush1.bf16.msra.mxu0 0
  %555 = vmatprep.subr.bf16.mxu0 0
  %556 = vmatpush1.bf16.msra.mxu0 0
  %557 = vmatprep.subr.bf16.mxu0 0
  %558 = vmatpush1.bf16.msra.mxu0 %v533
  %559 = vmatprep.subr.bf16.mxu0 0
  %560 = vmatpush2.bf16.msra.mxu0 0
  %561 = vmatprep.subr.bf16.mxu0 0
  %562 = vmatpush2.bf16.msra.mxu0 0
  %563 = vmatprep.subr.bf16.mxu0 0
  %564 = vmatpush2.bf16.msra.mxu0 0
  %565 = vmatprep.subr.bf16.mxu0 0
  %566 = vmatpush2.bf16.msra.mxu0 0
  %567 = vmatprep.subr.bf16.mxu0 0
  %568 = vmatpush2.bf16.msra.mxu0 0
  %569 = vmatprep.subr.bf16.mxu0 0
  %570 = vmatpush2.bf16.msra.mxu0 0
  %571 = vmatprep.subr.bf16.mxu0 0
  %572 = vmatpush2.bf16.msra.mxu0 0
  %573 = vmatprep.subr.bf16.mxu0 0
  %574 = vmatpush2.bf16.msra.mxu0 0
  %575 = vmatprep.mubr.bf16.mxu0 0
  %576 = vmatmul.mubr.bf16.gmra.mxu0 %v541
  %v577 = vpop.f32.mrf.mxu0
  %v578 = vadd.f32 %v537, %v577
  %v579 = vpop.f32.mrf.mxu0
  %v580 = vpop.f32.mrf.mxu0
  %v581 = vpop.f32.mrf.mxu0
  %582 = vdwg.mxu0
  %583 = vst [vmem:[%s4] sm:$0xf] %v578
  %585 = vrot.lane.b32.xlu0 %v524, 112
  %v586 = vpop.permute.xlu0 %585
  %vm588 = vcmp.lt.s32.totalorder %v117, 15
  %v589 = vsel %vm588, 1, 0
  %vm590 = vcmp.eq.s32.totalorder %v589, 1
  %v591 = vsel %vm590, %v524, %v586
  %593 = vrot.lane.b32.xlu0 %v591, 1
  %v594 = vpop.permute.xlu0 %593
  %vm596 = vcmp.lt.f32.partialorder %v594, %v524
  %vm597 = vcmp.eq.f32.partialorder %v594, %v524
  %vm598 = vcmp.ge.s32.totalorder %v117, 1
  %v599 = vsel %vm598, 1, 0
  %vm600 = vcmp.eq.s32.totalorder %v599, 1
  %vm601 = vmand %vm597, %vm600
  %vm602 = vmor %vm596, %vm601
  %v603 = vsel %vm602, 1, 0
  %v604 = vcvt.s32.f32 %v603
  %v605 = vadd.f32 %v604, 0.0
  %vm606 = vcmp.lt.s32.totalorder %v117, 14
  %v607 = vsel %vm606, 1, 0
  %vm608 = vcmp.eq.s32.totalorder %v607, 1
  %v609 = vsel %vm608, %v524, %v586
  %611 = vrot.lane.b32.xlu0 %v609, 2
  %v612 = vpop.permute.xlu0 %611
  %vm614 = vcmp.lt.f32.partialorder %v612, %v524
  %vm615 = vcmp.eq.f32.partialorder %v612, %v524
  %vm616 = vcmp.ge.s32.totalorder %v117, 2
  %v617 = vsel %vm616, 1, 0
  %vm618 = vcmp.eq.s32.totalorder %v617, 1
  %vm619 = vmand %vm615, %vm618
  %vm620 = vmor %vm614, %vm619
  %v621 = vsel %vm620, 1, 0
  %v622 = vcvt.s32.f32 %v621
  %v623 = vadd.f32 %v605, %v622
  %vm624 = vcmp.lt.s32.totalorder %v117, 13
  %v625 = vsel %vm624, 1, 0
  %vm626 = vcmp.eq.s32.totalorder %v625, 1
  %v627 = vsel %vm626, %v524, %v586
  %629 = vrot.lane.b32.xlu0 %v627, 3
  %v630 = vpop.permute.xlu0 %629
  %vm632 = vcmp.lt.f32.partialorder %v630, %v524
  %vm633 = vcmp.eq.f32.partialorder %v630, %v524
  %vm634 = vcmp.ge.s32.totalorder %v117, 3
  %v635 = vsel %vm634, 1, 0
  %vm636 = vcmp.eq.s32.totalorder %v635, 1
  %vm637 = vmand %vm633, %vm636
  %vm638 = vmor %vm632, %vm637
  %v639 = vsel %vm638, 1, 0
  %v640 = vcvt.s32.f32 %v639
  %v641 = vadd.f32 %v623, %v640
  %vm642 = vcmp.lt.s32.totalorder %v117, 12
  %v643 = vsel %vm642, 1, 0
  %vm644 = vcmp.eq.s32.totalorder %v643, 1
  %v645 = vsel %vm644, %v524, %v586
  %647 = vrot.lane.b32.xlu0 %v645, 4
  %v648 = vpop.permute.xlu0 %647
  %vm650 = vcmp.lt.f32.partialorder %v648, %v524
  %vm651 = vcmp.eq.f32.partialorder %v648, %v524
  %vm652 = vcmp.ge.s32.totalorder %v117, 4
  %v653 = vsel %vm652, 1, 0
  %vm654 = vcmp.eq.s32.totalorder %v653, 1
  %vm655 = vmand %vm651, %vm654
  %vm656 = vmor %vm650, %vm655
  %v657 = vsel %vm656, 1, 0
  %v658 = vcvt.s32.f32 %v657
  %v659 = vadd.f32 %v641, %v658
  %vm660 = vcmp.lt.s32.totalorder %v117, 11
  %v661 = vsel %vm660, 1, 0
  %vm662 = vcmp.eq.s32.totalorder %v661, 1
  %v663 = vsel %vm662, %v524, %v586
  %665 = vrot.lane.b32.xlu0 %v663, 5
  %v666 = vpop.permute.xlu0 %665
  %vm668 = vcmp.lt.f32.partialorder %v666, %v524
  %vm669 = vcmp.eq.f32.partialorder %v666, %v524
  %vm670 = vcmp.ge.s32.totalorder %v117, 5
  %v671 = vsel %vm670, 1, 0
  %vm672 = vcmp.eq.s32.totalorder %v671, 1
  %vm673 = vmand %vm669, %vm672
  %vm674 = vmor %vm668, %vm673
  %v675 = vsel %vm674, 1, 0
  %v676 = vcvt.s32.f32 %v675
  %v677 = vadd.f32 %v659, %v676
  %vm678 = vcmp.lt.s32.totalorder %v117, 10
  %v679 = vsel %vm678, 1, 0
  %vm680 = vcmp.eq.s32.totalorder %v679, 1
  %v681 = vsel %vm680, %v524, %v586
  %683 = vrot.lane.b32.xlu0 %v681, 6
  %v684 = vpop.permute.xlu0 %683
  %vm686 = vcmp.lt.f32.partialorder %v684, %v524
  %vm687 = vcmp.eq.f32.partialorder %v684, %v524
  %vm688 = vcmp.ge.s32.totalorder %v117, 6
  %v689 = vsel %vm688, 1, 0
  %vm690 = vcmp.eq.s32.totalorder %v689, 1
  %vm691 = vmand %vm687, %vm690
  %vm692 = vmor %vm686, %vm691
  %v693 = vsel %vm692, 1, 0
  %v694 = vcvt.s32.f32 %v693
  %v695 = vadd.f32 %v677, %v694
  %vm696 = vcmp.lt.s32.totalorder %v117, 9
  %v697 = vsel %vm696, 1, 0
  %vm698 = vcmp.eq.s32.totalorder %v697, 1
  %v699 = vsel %vm698, %v524, %v586
  %701 = vrot.lane.b32.xlu0 %v699, 7
  %v702 = vpop.permute.xlu0 %701
  %vm704 = vcmp.lt.f32.partialorder %v702, %v524
  %vm705 = vcmp.eq.f32.partialorder %v702, %v524
  %vm706 = vcmp.ge.s32.totalorder %v117, 7
  %v707 = vsel %vm706, 1, 0
  %vm708 = vcmp.eq.s32.totalorder %v707, 1
  %vm709 = vmand %vm705, %vm708
  %vm710 = vmor %vm704, %vm709
  %v711 = vsel %vm710, 1, 0
  %v712 = vcvt.s32.f32 %v711
  %v713 = vadd.f32 %v695, %v712
  %vm714 = vcmp.lt.s32.totalorder %v117, 8
  %v715 = vsel %vm714, 1, 0
  %vm716 = vcmp.eq.s32.totalorder %v715, 1
  %v717 = vsel %vm716, %v524, %v586
  %719 = vrot.lane.b32.xlu0 %v717, 8
  %v720 = vpop.permute.xlu0 %719
  %vm722 = vcmp.lt.f32.partialorder %v720, %v524
  %vm723 = vcmp.eq.f32.partialorder %v720, %v524
  %vm724 = vcmp.ge.s32.totalorder %v117, 8
  %v725 = vsel %vm724, 1, 0
  %vm726 = vcmp.eq.s32.totalorder %v725, 1
  %vm727 = vmand %vm723, %vm726
  %vm728 = vmor %vm722, %vm727
  %v729 = vsel %vm728, 1, 0
  %v730 = vcvt.s32.f32 %v729
  %v731 = vadd.f32 %v713, %v730
  %vm732 = vcmp.lt.s32.totalorder %v117, 7
  %v733 = vsel %vm732, 1, 0
  %vm734 = vcmp.eq.s32.totalorder %v733, 1
  %v735 = vsel %vm734, %v524, %v586
  %737 = vrot.lane.b32.xlu0 %v735, 9
  %v738 = vpop.permute.xlu0 %737
  %vm740 = vcmp.lt.f32.partialorder %v738, %v524
  %vm741 = vcmp.eq.f32.partialorder %v738, %v524
  %vm742 = vcmp.ge.s32.totalorder %v117, 9
  %v743 = vsel %vm742, 1, 0
  %vm744 = vcmp.eq.s32.totalorder %v743, 1
  %vm745 = vmand %vm741, %vm744
  %vm746 = vmor %vm740, %vm745
  %v747 = vsel %vm746, 1, 0
  %v748 = vcvt.s32.f32 %v747
  %v749 = vadd.f32 %v731, %v748
  %vm750 = vcmp.lt.s32.totalorder %v117, 6
  %v751 = vsel %vm750, 1, 0
  %vm752 = vcmp.eq.s32.totalorder %v751, 1
  %v753 = vsel %vm752, %v524, %v586
  %755 = vrot.lane.b32.xlu0 %v753, 10
  %v756 = vpop.permute.xlu0 %755
  %vm758 = vcmp.lt.f32.partialorder %v756, %v524
  %vm759 = vcmp.eq.f32.partialorder %v756, %v524
  %vm760 = vcmp.ge.s32.totalorder %v117, 10
  %v761 = vsel %vm760, 1, 0
  %vm762 = vcmp.eq.s32.totalorder %v761, 1
  %vm763 = vmand %vm759, %vm762
  %vm764 = vmor %vm758, %vm763
  %v765 = vsel %vm764, 1, 0
  %v766 = vcvt.s32.f32 %v765
  %v767 = vadd.f32 %v749, %v766
  %vm768 = vcmp.lt.s32.totalorder %v117, 5
  %v769 = vsel %vm768, 1, 0
  %vm770 = vcmp.eq.s32.totalorder %v769, 1
  %v771 = vsel %vm770, %v524, %v586
  %773 = vrot.lane.b32.xlu0 %v771, 11
  %v774 = vpop.permute.xlu0 %773
  %vm776 = vcmp.lt.f32.partialorder %v774, %v524
  %vm777 = vcmp.eq.f32.partialorder %v774, %v524
  %vm778 = vcmp.ge.s32.totalorder %v117, 11
  %v779 = vsel %vm778, 1, 0
  %vm780 = vcmp.eq.s32.totalorder %v779, 1
  %vm781 = vmand %vm777, %vm780
  %vm782 = vmor %vm776, %vm781
  %v783 = vsel %vm782, 1, 0
  %v784 = vcvt.s32.f32 %v783
  %v785 = vadd.f32 %v767, %v784
  %vm786 = vcmp.lt.s32.totalorder %v117, 4
  %v787 = vsel %vm786, 1, 0
  %vm788 = vcmp.eq.s32.totalorder %v787, 1
  %v789 = vsel %vm788, %v524, %v586
  %791 = vrot.lane.b32.xlu0 %v789, 12
  %v792 = vpop.permute.xlu0 %791
  %vm794 = vcmp.lt.f32.partialorder %v792, %v524
  %vm795 = vcmp.eq.f32.partialorder %v792, %v524
  %vm796 = vcmp.ge.s32.totalorder %v117, 12
  %v797 = vsel %vm796, 1, 0
  %vm798 = vcmp.eq.s32.totalorder %v797, 1
  %vm799 = vmand %vm795, %vm798
  %vm800 = vmor %vm794, %vm799
  %v801 = vsel %vm800, 1, 0
  %v802 = vcvt.s32.f32 %v801
  %v803 = vadd.f32 %v785, %v802
  %vm804 = vcmp.lt.s32.totalorder %v117, 3
  %v805 = vsel %vm804, 1, 0
  %vm806 = vcmp.eq.s32.totalorder %v805, 1
  %v807 = vsel %vm806, %v524, %v586
  %809 = vrot.lane.b32.xlu0 %v807, 13
  %v810 = vpop.permute.xlu0 %809
  %vm812 = vcmp.lt.f32.partialorder %v810, %v524
  %vm813 = vcmp.eq.f32.partialorder %v810, %v524
  %vm814 = vcmp.ge.s32.totalorder %v117, 13
  %v815 = vsel %vm814, 1, 0
  %vm816 = vcmp.eq.s32.totalorder %v815, 1
  %vm817 = vmand %vm813, %vm816
  %vm818 = vmor %vm812, %vm817
  %v819 = vsel %vm818, 1, 0
  %v820 = vcvt.s32.f32 %v819
  %v821 = vadd.f32 %v803, %v820
  %vm822 = vcmp.lt.s32.totalorder %v117, 2
  %v823 = vsel %vm822, 1, 0
  %vm824 = vcmp.eq.s32.totalorder %v823, 1
  %v825 = vsel %vm824, %v524, %v586
  %827 = vrot.lane.b32.xlu0 %v825, 14
  %v828 = vpop.permute.xlu0 %827
  %vm830 = vcmp.lt.f32.partialorder %v828, %v524
  %vm831 = vcmp.eq.f32.partialorder %v828, %v524
  %vm832 = vcmp.ge.s32.totalorder %v117, 14
  %v833 = vsel %vm832, 1, 0
  %vm834 = vcmp.eq.s32.totalorder %v833, 1
  %vm835 = vmand %vm831, %vm834
  %vm836 = vmor %vm830, %vm835
  %v837 = vsel %vm836, 1, 0
  %v838 = vcvt.s32.f32 %v837
  %v839 = vadd.f32 %v821, %v838
  %vm840 = vcmp.lt.s32.totalorder %v117, 1
  %v841 = vsel %vm840, 1, 0
  %vm842 = vcmp.eq.s32.totalorder %v841, 1
  %v843 = vsel %vm842, %v524, %v586
  %845 = vrot.lane.b32.xlu0 %v843, 15
  %v846 = vpop.permute.xlu0 %845
  %vm848 = vcmp.lt.f32.partialorder %v846, %v524
  %vm849 = vcmp.eq.f32.partialorder %v846, %v524
  %vm850 = vcmp.ge.s32.totalorder %v117, 15
  %v851 = vsel %vm850, 1, 0
  %vm852 = vcmp.eq.s32.totalorder %v851, 1
  %vm853 = vmand %vm849, %vm852
  %vm854 = vmor %vm848, %vm853
  %v855 = vsel %vm854, 1, 0
  %v856 = vcvt.s32.f32 %v855
  %v857 = vadd.f32 %v839, %v856
  %v858 = vlaneseq
  %v859 = vshrl.u32 %v858, 7
  %v860 = vadd.s32 %v859, 8
  %v861 = vcvt.f32.s32.to.zero.pseudo %v857
  %v862 = vlaneseq
  %v863 = vshrl.u32 %v862, 7
  %v864 = vsub.s32 0, %v863
  %v865 = vrot.slane %v861, %v864
  %vm866 = vcmp.eq.s32.totalorder %v865, %v859
  %vm867 = vcmp.eq.s32.totalorder %v865, %v860
  %v868 = vsel %vm866, 1, 0
  %v869 = vsel %vm867, 1, 0
  %v870 = vcvt.s32.f32 %v868
  %v871 = vcvt.s32.f32 %v869
  %v872 = vlaneseq
  %v873 = vshrl.u32 %v872, 7
  %v874 = vsub.s32 1, %v873
  %v875 = vrot.slane %v861, %v874
  %vm876 = vcmp.eq.s32.totalorder %v875, %v859
  %vm877 = vcmp.eq.s32.totalorder %v875, %v860
  %v878 = vsel %vm876, 1, 0
  %v879 = vsel %vm877, 1, 0
  %v880 = vcvt.s32.f32 %v878
  %v881 = vcvt.s32.f32 %v879
  %v882 = vpack.c.bf16 %v871, %v870
  %v883 = vpack.c.bf16 %v881, %v880
  %v885 = vsel %vm474, %v38, 0
  %887 = vmatprep.subr.bf16.mxu0 0
  %888 = vmatpush1.bf16.msra.mxu0 0
  %889 = vmatprep.subr.bf16.mxu0 0
  %890 = vmatpush1.bf16.msra.mxu0 0
  %891 = vmatprep.subr.bf16.mxu0 0
  %892 = vmatpush1.bf16.msra.mxu0 0
  %893 = vmatprep.subr.bf16.mxu0 0
  %894 = vmatpush1.bf16.msra.mxu0 0
  %895 = vmatprep.subr.bf16.mxu0 0
  %896 = vmatpush1.bf16.msra.mxu0 0
  %897 = vmatprep.subr.bf16.mxu0 0
  %898 = vmatpush1.bf16.msra.mxu0 0
  %899 = vmatprep.subr.bf16.mxu0 0
  %900 = vmatpush1.bf16.msra.mxu0 %v883
  %901 = vmatprep.subr.bf16.mxu0 0
  %902 = vmatpush1.bf16.msra.mxu0 %v882
  %903 = vmatprep.subr.bf16.mxu0 0
  %904 = vmatpush2.bf16.msra.mxu0 0
  %905 = vmatprep.subr.bf16.mxu0 0
  %906 = vmatpush2.bf16.msra.mxu0 0
  %907 = vmatprep.subr.bf16.mxu0 0
  %908 = vmatpush2.bf16.msra.mxu0 0
  %909 = vmatprep.subr.bf16.mxu0 0
  %910 = vmatpush2.bf16.msra.mxu0 0
  %911 = vmatprep.subr.bf16.mxu0 0
  %912 = vmatpush2.bf16.msra.mxu0 0
  %913 = vmatprep.subr.bf16.mxu0 0
  %914 = vmatpush2.bf16.msra.mxu0 0
  %915 = vmatprep.subr.bf16.mxu0 0
  %916 = vmatpush2.bf16.msra.mxu0 0
  %917 = vmatprep.subr.bf16.mxu0 0
  %918 = vmatpush2.bf16.msra.mxu0 0
  %919 = vmatprep.mubr.bf16.mxu0 0
  %920 = vmatmul.mubr.bf16.gmra.mxu0 %v885
  %v921 = vpop.f32.mrf.mxu0
  %v922 = vadd.f32 0.0, %v921
  %v923 = vpop.f32.mrf.mxu0
  %v924 = vpop.f32.mrf.mxu0
  %v925 = vpop.f32.mrf.mxu0
  %926 = vdwg.mxu0
  %v927 = vrot.slane %v524, 7
  %v929 = vrot.slane %v524, 6
  %v931 = vsel %vm101, %v524, %v927
  %v932 = vsel %vm103, %v931, %v927
  %v933 = vsel %vm105, %v932, %v929
  %v934 = vmul.f32 %v922, %v933
  %v935 = vpack.c.bf16 %v934, %v934
  %937 = vset.pattern.permute.xlu0 0
  %938 = vperm.xlu0 %937, %v55
  %v939 = vpop.permute.xlu0 %938
  %v957 = vunpack.c.l.b16 %v56
  %v958 = vunpack.c.l.b16 %v57
  %v959 = vunpack.c.l.b16 %v58
  %v960 = vunpack.c.l.b16 %v59
  %v961 = vunpack.c.l.b16 %v60
  %v962 = vunpack.c.l.b16 %v61
  %v963 = vunpack.c.l.b16 %v62
  %v964 = vunpack.c.l.b16 %v63
  %v965 = vunpack.c.l.b16 %v64
  %v966 = vunpack.c.l.b16 %v65
  %v967 = vunpack.c.l.b16 %v66
  %v968 = vunpack.c.l.b16 %v67
  %v969 = vunpack.c.l.b16 %v68
  %v970 = vunpack.c.l.b16 %v69
  %v971 = vunpack.c.l.b16 %v70
  %v972 = vunpack.c.l.b16 %v71
  %v973 = vpack.c.b16 %v958, %v957
  %v974 = vpack.c.b16 %v960, %v959
  %v975 = vpack.c.b16 %v962, %v961
  %v976 = vpack.c.b16 %v964, %v963
  %v977 = vpack.c.b16 %v966, %v965
  %v978 = vpack.c.b16 %v968, %v967
  %v979 = vpack.c.b16 %v970, %v969
  %v980 = vpack.c.b16 %v972, %v971
  %989 = vmatprep.subr.bf16.mxu0 0
  %990 = vmatpush1.bf16.msra.mxu0 %v980
  %991 = vmatprep.subr.bf16.mxu0 0
  %992 = vmatpush1.bf16.msra.mxu0 %v979
  %993 = vmatprep.subr.bf16.mxu0 0
  %994 = vmatpush1.bf16.msra.mxu0 %v978
  %995 = vmatprep.subr.bf16.mxu0 0
  %996 = vmatpush1.bf16.msra.mxu0 %v977
  %997 = vmatprep.subr.bf16.mxu0 0
  %998 = vmatpush1.bf16.msra.mxu0 %v976
  %999 = vmatprep.subr.bf16.mxu0 0
  %1000 = vmatpush1.bf16.msra.mxu0 %v975
  %1001 = vmatprep.subr.bf16.mxu0 0
  %1002 = vmatpush1.bf16.msra.mxu0 %v974
  %1003 = vmatprep.subr.bf16.mxu0 0
  %1004 = vmatpush1.bf16.msra.mxu0 %v973
  %1005 = vmatprep.subr.bf16.mxu0 0
  %1006 = vmatpush2.bf16.msra.mxu0 0
  %1007 = vmatprep.subr.bf16.mxu0 0
  %1008 = vmatpush2.bf16.msra.mxu0 0
  %1009 = vmatprep.subr.bf16.mxu0 0
  %1010 = vmatpush2.bf16.msra.mxu0 0
  %1011 = vmatprep.subr.bf16.mxu0 0
  %1012 = vmatpush2.bf16.msra.mxu0 0
  %1013 = vmatprep.subr.bf16.mxu0 0
  %1014 = vmatpush2.bf16.msra.mxu0 0
  %1015 = vmatprep.subr.bf16.mxu0 0
  %1016 = vmatpush2.bf16.msra.mxu0 0
  %1017 = vmatprep.subr.bf16.mxu0 0
  %1018 = vmatpush2.bf16.msra.mxu0 0
  %1019 = vmatprep.subr.bf16.mxu0 0
  %1020 = vmatpush2.bf16.msra.mxu0 0
  %1021 = vmatprep.mubr.bf16.mxu0 0
  %1022 = vmatmul.mubr.bf16.gmra.mxu0 %v935
  %v1023 = vpop.f32.mrf.mxu0
  %v1024 = vadd.f32 %v939, %v1023
  %v1025 = vpop.f32.mrf.mxu0
  %v1026 = vpop.f32.mrf.mxu0
  %v1027 = vpop.f32.mrf.mxu0
  %1028 = vdwg.mxu0
  %vm1029 = vcmask 60416
  %1030 = vst.msk [vmem:[%s5] sm:$0xf] %vm1029, %v1024
  // Predicated region
  $region18: #{network_forward.1} parent=0 // pred_check
    _
  $region19: #{network_forward.1} parent=0 // pred_check_branch
    %1032 = sbr.rel (0) target = $region21
  $region20: #{network_forward.1} parent=0 // pred_region
    _
  $region21: #{network_forward.1} parent=0 // pred_fallthru
    _
  // Predicated region
  $region22: #{network_forward.1} parent=0 // pred_check
    _
  $region23: #{network_forward.1} parent=0 // pred_check_branch
    %1034 = sbr.rel (0) target = $region25
  $region24: #{network_forward.1} parent=0 // pred_region
    _
  $region25: #{network_forward.1} parent=0 // pred_fallthru
    _
  // Predicated region
  $region26: #{network_forward.1} parent=0 // pred_check
    _
  $region27: #{network_forward.1} parent=0 // pred_check_branch
    %1036 = sbr.rel (0) target = $region29
  $region28: #{network_forward.1} parent=0 // pred_region
    _
  $region29: #{network_forward.1} parent=0 // pred_fallthru
    _
  // Predicated region
  $region30: #{network_forward.1} parent=0 // pred_check
    _
  $region31: #{network_forward.1} parent=0 // pred_check_branch
    %1038 = sbr.rel (0) target = $region33
  $region32: #{network_forward.1} parent=0 // pred_region
    _
  $region33: #{network_forward.1} parent=0 // pred_fallthru
    _

</llo_original>
